<compile_context>
chip_gen: v6e
topology: v6e:2x2x1
jax: 0.10.0
libtpu: 0.0.40
codegen_flags: <defaults>
</compile_context>

<pallas_src>
import functools

import jax
import jax.numpy as jnp
from jax import lax
from jax.experimental import pallas as pl
from jax.experimental.pallas import tpu as pltpu

LANE = 128
SUBLANE = 8


def _round_up(x, m):
    return ((x + m - 1) // m) * m


def _vmem_capacity_bytes():
    """Physical VMEM per TensorCore; conservative 64 MiB (v7x) on failure."""
    try:
        return int(pltpu.get_tpu_info().vmem_capacity_bytes)
    except Exception:
        return 64 * 1024 * 1024


# --------------------------------------------------------------------------
# Path 1: small, VMEM-resident tables -> fused one-hot matmul gather.
# --------------------------------------------------------------------------
def _onehot_kernel(users_ref, books_ref, tab_ref, o_ref, *, f_pad, ru_pad):
    users = users_ref[0]            # (1, TILE_B) int32, batch on the lane axis
    books = books_ref[0]            # (1, TILE_B) int32
    tab = tab_ref[...]              # (2*f_pad, R_total) block-diag [U^T 0; 0 B^T]

    r_total = tab.shape[1]
    tile_b = users.shape[1]

    # One iota + two compares + one OR builds BOTH one-hots stacked along rows
    # (user id in the top R_u band, book id shifted into the bottom R_b band).
    rows = lax.broadcasted_iota(jnp.int32, (r_total, tile_b), 0)
    onehot = ((rows == users) | (rows == (books + ru_pad))).astype(tab.dtype)

    # Single fused gather matmul on the MXU; HIGHEST precision so the "gather"
    # is exact (multiplying by an exact 1.0, accumulated in f32).
    g = jnp.dot(tab, onehot,
                preferred_element_type=jnp.float32,
                precision=lax.Precision.HIGHEST)          # (2*f_pad, TILE_B)

    gu = g[:f_pad]                  # gathered user embeddings, (f_pad, TILE_B)
    gb = g[f_pad:]                  # gathered book embeddings, (f_pad, TILE_B)

    # Full-lane-width VPU multiply + sublane (XLU) reduce -> lane-dense slab.
    o_ref[0] = jnp.sum(gu * gb, axis=0, keepdims=True).astype(o_ref.dtype)


def _embedding_dot_onehot(cats, tab, *, n_users, n_books, f_pad, ru_pad,
                          tile_b, limit_cap):
    batch = cats.shape[0]
    dtype = tab.dtype

    users = jnp.clip(cats[:, 0].astype(jnp.int32), 0, n_users - 1)
    books = jnp.clip(cats[:, 1].astype(jnp.int32), 0, n_books - 1)

    if tile_b is None:
        # >= 2 lane-dense tiles whenever batch allows it so a v7x megacore can
        # split the "parallel" axis across both TensorCores; <= 512 keeps the
        # (R, TILE_B) one-hot operand modest.
        tile_b = min(512, _round_up(max((batch + 1) // 2, 1), LANE))
    tile_b = _round_up(tile_b, LANE)

    padded_batch = _round_up(max(batch, 1), tile_b)
    num_tiles = padded_batch // tile_b
    pad = padded_batch - batch

    users_p = jnp.pad(users, (0, pad)).reshape(num_tiles, 1, tile_b)
    books_p = jnp.pad(books, (0, pad)).reshape(num_tiles, 1, tile_b)

    kernel = functools.partial(_onehot_kernel, f_pad=f_pad, ru_pad=ru_pad)

    out = pl.pallas_call(
        kernel,
        out_shape=jax.ShapeDtypeStruct((num_tiles, 1, tile_b), dtype),
        grid=(num_tiles,),
        in_specs=[
            pl.BlockSpec((1, 1, tile_b), lambda i: (i, 0, 0)),   # user id tile
            pl.BlockSpec((1, 1, tile_b), lambda i: (i, 0, 0)),   # book id tile
            # Whole packed table lives in VMEM once for the entire grid:
            # single buffered (no pipelining, no double buffer).  Note: with a
            # "parallel" grid axis each v7x TensorCore holds its own copy.
            pl.BlockSpec(memory_space=pltpu.MemorySpace.VMEM),
        ],
        out_specs=pl.BlockSpec((1, 1, tile_b), lambda i: (i, 0, 0)),
        compiler_params=pltpu.CompilerParams(
            dimension_semantics=("parallel",),
            vmem_limit_bytes=int(limit_cap),
        ),
    )(users_p, books_p, tab)

    return out.reshape(padded_batch)[:batch]


# --------------------------------------------------------------------------
# Path 2: large tables -> scalar-prefetch ids + double-buffered DMA row gather.
# --------------------------------------------------------------------------
def _dma_gather_kernel(users_ref, books_ref,          # scalar prefetch (SMEM)
                       u_hbm, b_hbm,                  # tables (HBM, pl.ANY)
                       o_ref,                         # (1, TILE_B, 1) out tile
                       u_buf, b_buf,                  # (2, TILE_B, F) scratch
                       sem_u, sem_b):                 # per-slot DMA semaphores
    i = pl.program_id(0)
    nt = pl.num_programs(0)
    tile_b = u_buf.shape[1]

    def issue_tile(t, slot):
        base = t * tile_b

        def body(j, carry):
            uid = users_ref[base + j]
            bid = books_ref[base + j]
            pltpu.make_async_copy(u_hbm.at[uid], u_buf.at[slot, j],
                                  sem_u.at[slot]).start()
            pltpu.make_async_copy(b_hbm.at[bid], b_buf.at[slot, j],
                                  sem_b.at[slot]).start()
            return carry

        lax.fori_loop(0, tile_b, body, 0)

    slot = lax.rem(i, 2)

    # Prime the pipeline on the first grid step.
    @pl.when(i == 0)
    def _():
        issue_tile(0, 0)

    # Prefetch the next batch tile's rows into the other buffer slot before
    # waiting on the current one (double buffering; hence "arbitrary" grid).
    @pl.when(i + 1 < nt)
    def _():
        issue_tile(i + 1, 1 - slot)

    # Wait for every row DMA of the current tile.  All descriptors on this
    # slot's semaphore have identical row size, so tile_b waits per table
    # fully drain exactly what was issued for this tile.
    def wait_body(j, carry):
        pltpu.make_async_copy(u_hbm.at[0], u_buf.at[slot, j],
                              sem_u.at[slot]).wait()
        pltpu.make_async_copy(b_hbm.at[0], b_buf.at[slot, j],
                              sem_b.at[slot]).wait()
        return carry

    lax.fori_loop(0, tile_b, wait_body, 0)

    prod = (u_buf[slot].astype(jnp.float32) * b_buf[slot].astype(jnp.float32))
    o_ref[0] = jnp.sum(prod, axis=1, keepdims=True).astype(o_ref.dtype)


def _embedding_dot_dma(cats, u_weight, b_weight, *, tile_b, limit_cap):
    batch = cats.shape[0]
    n_users, n_factors = u_weight.shape
    n_books = b_weight.shape[0]
    dtype = u_weight.dtype

    users = jnp.clip(cats[:, 0].astype(jnp.int32), 0, n_users - 1)
    books = jnp.clip(cats[:, 1].astype(jnp.int32), 0, n_books - 1)

    tile_b = _round_up(max(tile_b, SUBLANE), SUBLANE)
    padded_batch = _round_up(max(batch, 1), tile_b)
    num_tiles = padded_batch // tile_b
    pad = padded_batch - batch
    users_p = jnp.pad(users, (0, pad))
    books_p = jnp.pad(books, (0, pad))

    grid_spec = pltpu.PrefetchScalarGridSpec(
        num_scalar_prefetch=2,
        grid=(num_tiles,),
        in_specs=[
            pl.BlockSpec(memory_space=pl.ANY),      # user table stays in HBM
            pl.BlockSpec(memory_space=pl.ANY),      # book table stays in HBM
        ],
        out_specs=pl.BlockSpec((1, tile_b, 1),
                               lambda i, users_sref, books_sref: (i, 0, 0)),
        scratch_shapes=[
            pltpu.VMEM((2, tile_b, n_factors), dtype),   # gathered user rows
            pltpu.VMEM((2, tile_b, n_factors), dtype),   # gathered book rows
            pltpu.SemaphoreType.DMA((2,)),               # per-slot user sems
            pltpu.SemaphoreType.DMA((2,)),               # per-slot book sems
        ],
    )

    out = pl.pallas_call(
        _dma_gather_kernel,
        out_shape=jax.ShapeDtypeStruct((num_tiles, tile_b, 1), dtype),
        grid_spec=grid_spec,
        compiler_params=pltpu.CompilerParams(
            # Cross-step carry (prefetched buffer slot) -> must be arbitrary.
            dimension_semantics=("arbitrary",),
            vmem_limit_bytes=int(limit_cap),
        ),
    )(users_p, books_p, u_weight, b_weight)

    return out.reshape(padded_batch)[:batch]


# --------------------------------------------------------------------------
# Public API.
# --------------------------------------------------------------------------
def make_embedding_dot(u_weight, b_weight, *, tile_b=None, force_path=None):
    """Preprocess the embedding tables once and return forward(cats, conts).

    Equivalent to PyTorch EmbeddingDot.forward: (u(users) * b(books)).sum(1).
    """
    n_users, n_factors = u_weight.shape
    n_books, n_factors_b = b_weight.shape
    assert n_factors == n_factors_b
    dtype = u_weight.dtype
    itemsize = jnp.dtype(dtype).itemsize

    vmem_cap = _vmem_capacity_bytes()
    # Generation-aware scoped-VMEM cap: ~100 MiB on 128 MiB parts (v5e/v6e),
    # ~44 MiB on 64 MiB parts (v7x, per TensorCore).
    limit_cap = max(32 << 20, min(100 << 20, vmem_cap - (20 << 20)))

    f_pad = _round_up(n_factors, SUBLANE)
    ru_pad = _round_up(n_users, LANE)       # 128-aligned K for the MXU LHS
    rb_pad = _round_up(n_books, LANE)
    r_total = ru_pad + rb_pad
    tab_bytes = 2 * f_pad * r_total * itemsize

    if force_path is None:
        # One-hot gather is O(F*R) MXU + O(R*TILE_B) VPU per tile, i.e. linear
        # in table rows; beyond a few hundred rows (earlier still on v5e) the
        # R-independent DMA row gather wins — and it is required whenever the
        # packed table cannot stay VMEM-resident on this generation.
        use_onehot = ((n_users + n_books) <= 512 and
                      tab_bytes + (16 << 20) <= limit_cap)
    else:
        use_onehot = (force_path == "onehot")

    if use_onehot:
        # Hoisted table packing: done ONCE here, not per forward call.
        # Block-diagonal (2F, R_u+R_b) LHS so both gathers fuse into a single
        # matmul with doubled M-dim fill.
        tab = jnp.zeros((2 * f_pad, r_total), dtype)
        tab = tab.at[:n_factors, :n_users].set(u_weight.T.astype(dtype))
        tab = tab.at[f_pad:f_pad + n_factors,
                     ru_pad:ru_pad + n_books].set(b_weight.T.astype(dtype))

        def forward(cats, conts=None):   # conts unused, as in the PyTorch module
            return _embedding_dot_onehot(
                cats, tab, n_users=n_users, n_books=n_books,
                f_pad=f_pad, ru_pad=ru_pad, tile_b=tile_b, limit_cap=limit_cap)
    else:
        tb = tile_b if tile_b is not None else 128

        def forward(cats, conts=None):   # raw tables, no per-call preprocessing
            return _embedding_dot_dma(
                cats, u_weight, b_weight, tile_b=tb, limit_cap=limit_cap)

    return forward


def embedding_dot(cats, u_weight, b_weight, conts=None, *,
                  tile_b=None, force_path=None):
    """One-shot convenience wrapper (prefer make_embedding_dot to amortize
    the table preprocessing across calls)."""
    return make_embedding_dot(u_weight, b_weight, tile_b=tile_b,
                              force_path=force_path)(cats, conts)


if __name__ == "__main__":
    n_users, n_books, n_factors = 10, 12, 32
    batch = 8

    key = jax.random.PRNGKey(0)
    k_u, k_b, k_cu, k_cb = jax.random.split(key, 4)

    # nn.Embedding weights with .uniform_(0, 0.05), deterministic init.
    u_weight = jax.random.uniform(k_u, (n_users, n_factors), jnp.float32, 0.0, 0.05)
    b_weight = jax.random.uniform(k_b, (n_books, n_factors), jnp.float32, 0.0, 0.05)

    users = jax.random.randint(k_cu, (batch,), 0, n_users, dtype=jnp.int32)
    books = jax.random.randint(k_cb, (batch,), 0, n_books, dtype=jnp.int32)
    cats = jnp.stack([users, books], axis=1)       # (batch, 2)
    conts = jnp.zeros((batch, 0), jnp.float32)     # unused by forward (as in PyTorch)

    ref = (u_weight[cats[:, 0]] * b_weight[cats[:, 1]]).sum(axis=1)

    # Small tables -> auto-selects the VMEM-resident fused one-hot path.
    fwd = make_embedding_dot(u_weight, b_weight)
    out = jax.block_until_ready(fwd(cats, conts))
    assert out.shape == (batch,), out.shape
    assert jnp.allclose(out, ref, atol=1e-5, rtol=1e-5), jnp.max(jnp.abs(out - ref))

    # Also exercise the large-table path: scalar-prefetch + DMA row gather.
    fwd_dma = make_embedding_dot(u_weight, b_weight, force_path="dma")
    out_dma = jax.block_until_ready(fwd_dma(cats, conts))
    assert out_dma.shape == (batch,), out_dma.shape
    assert jnp.allclose(out_dma, ref, atol=1e-5, rtol=1e-5), jnp.max(jnp.abs(out_dma - ref))

    print("KERNEL_OK")
</pallas_src>

<mosaic_0001>
module attributes {stable_mosaic.version = 11 : i64} {
  func.func @_onehot_kernel(%arg0: i32, %arg1: memref<1x1x128xi32, #tpu.memory_space<vmem>>, %arg2: memref<1x1x128xi32, #tpu.memory_space<vmem>>, %arg3: memref<64x256xf32, #tpu.memory_space<vmem>>, %arg4: memref<1x1x128xf32, #tpu.memory_space<vmem>>) attributes {dimension_semantics = [#tpu.dimension_semantics<parallel>], iteration_bounds = array<i64: 1>, scalar_prefetch = 0 : i64, scratch_operands = 0 : i64, tpu.core_type = #tpu.core_type<tc>, window_params = [{transform_indices = @transform_0, window_bounds = array<i64: 1, 1, 128>}, {transform_indices = @transform_1, window_bounds = array<i64: 1, 1, 128>}, {pipeline_mode = #tpu.pipeline_mode<synchronous>, transform_indices = @transform_2, window_bounds = array<i64: 64, 256>}, {transform_indices = @transform_3, window_bounds = array<i64: 1, 1, 128>}]} {
    %c0 = arith.constant 0 : index
    %c0_0 = arith.constant 0 : index
    %c0_1 = arith.constant 0 : index
    %0 = vector.load %arg1[%c0, %c0_0, %c0_1] : memref<1x1x128xi32, #tpu.memory_space<vmem>>, vector<1x1x128xi32>
    %1 = vector.shape_cast %0 : vector<1x1x128xi32> to vector<1x128xi32>
    %c0_2 = arith.constant 0 : index
    %c0_3 = arith.constant 0 : index
    %c0_4 = arith.constant 0 : index
    %2 = vector.load %arg2[%c0_2, %c0_3, %c0_4] : memref<1x1x128xi32, #tpu.memory_space<vmem>>, vector<1x1x128xi32>
    %3 = vector.shape_cast %2 : vector<1x1x128xi32> to vector<1x128xi32>
    %c0_5 = arith.constant 0 : index
    %c0_6 = arith.constant 0 : index
    %4 = vector.load %arg3[%c0_5, %c0_6] : memref<64x256xf32, #tpu.memory_space<vmem>>, vector<64x256xf32>
    %5 = tpu.iota {dimensions = array<i32: 0>} : vector<256x128xi32>
    %6 = vector.broadcast %1 : vector<1x128xi32> to vector<256x128xi32>
    %7 = arith.cmpi eq, %5, %6 : vector<256x128xi32>
    %c128_i32 = arith.constant 128 : i32
    %8 = vector.broadcast %c128_i32 : i32 to vector<1x128xi32>
    %9 = arith.addi %3, %8 : vector<1x128xi32>
    %10 = vector.broadcast %9 : vector<1x128xi32> to vector<256x128xi32>
    %11 = arith.cmpi eq, %5, %10 : vector<256x128xi32>
    %12 = arith.ori %7, %11 : vector<256x128xi1>
    %13 = arith.extui %12 : vector<256x128xi1> to vector<256x128xi32>
    %14 = arith.sitofp %13 : vector<256x128xi32> to vector<256x128xf32>
    %cst = arith.constant dense<0.000000e+00> : vector<64x128xf32>
    %15 = tpu.matmul %4, %14, %cst {dimension_numbers = #tpu.dot_dimension_numbers<[1], [0], [0], [1], [0, 0, 1, 1], [], []>, precision = #tpu.contract_precision<fp32>} : vector<64x256xf32>, vector<256x128xf32>, vector<64x128xf32> -> vector<64x128xf32>
    %16 = vector.extract_strided_slice %15 {offsets = [0, 0], sizes = [32, 128], strides = [1, 1]} : vector<64x128xf32> to vector<32x128xf32>
    %17 = vector.extract_strided_slice %15 {offsets = [32, 0], sizes = [32, 128], strides = [1, 1]} : vector<64x128xf32> to vector<32x128xf32>
    %18 = arith.mulf %16, %17 : vector<32x128xf32>
    %cst_7 = arith.constant dense<0.000000e+00> : vector<128xf32>
    %19 = vector.multi_reduction <add>, %18, %cst_7 [0] : vector<32x128xf32> to vector<128xf32>
    %20 = vector.shape_cast %19 : vector<128xf32> to vector<1x128xf32>
    %c0_8 = arith.constant 0 : index
    %c0_9 = arith.constant 0 : index
    %c0_10 = arith.constant 0 : index
    %21 = vector.load %arg4[%c0_8, %c0_9, %c0_10] : memref<1x1x128xf32, #tpu.memory_space<vmem>>, vector<1x1x128xf32>
    %22 = vector.shape_cast %21 : vector<1x1x128xf32> to vector<1x128xf32>
    %23 = vector.shape_cast %20 : vector<1x128xf32> to vector<1x1x128xf32>
    tpu.vector_store %arg4[%c0_8, %c0_9, %c0_10], %23 {strides = array<i32>} : memref<1x1x128xf32, #tpu.memory_space<vmem>>, vector<1x1x128xf32>,
    return
  }
  func.func @transform_0(%arg0: i32) -> (i32, i32, i32) {
    %c0_i32 = arith.constant 0 : i32
    %c0_i32_0 = arith.constant 0 : i32
    %c0_i32_1 = arith.constant 0 : i32
    return %arg0, %c0_i32, %c0_i32_0 : i32, i32, i32
  }
  func.func @transform_1(%arg0: i32) -> (i32, i32, i32) {
    %c0_i32 = arith.constant 0 : i32
    %c0_i32_0 = arith.constant 0 : i32
    %c0_i32_1 = arith.constant 0 : i32
    return %arg0, %c0_i32, %c0_i32_0 : i32, i32, i32
  }
  func.func @transform_2(%arg0: i32) -> (i32, i32) {
    %c0_i32 = arith.constant 0 : i32
    %c0_i32_0 = arith.constant 0 : i32
    %c0_i32_1 = arith.constant 0 : i32
    return %c0_i32, %c0_i32_0 : i32, i32
  }
  func.func @transform_3(%arg0: i32) -> (i32, i32, i32) {
    %c0_i32 = arith.constant 0 : i32
    %c0_i32_0 = arith.constant 0 : i32
    %c0_i32_1 = arith.constant 0 : i32
    return %arg0, %c0_i32, %c0_i32_0 : i32, i32, i32
  }
}

</mosaic_0001>

<llo_original>
// kernel: tpu_custom_call.1
$region0: #{tpu_custom_call.1}
  #allocation0 [shape = 'u32[]', space=smem, size = 0x4, offset = 0x4, fixed_abs, tag = 'smem constant byte address 0x4 - core index']
  #allocation1 [shape = 'u32[144,128]{1,0:T(1,128)}', space=vmem, size = 0x12000, scoped, tag = 'internal scratch']
  %s0 = inlined_call_operand.hbm [shape: s32[1,1,128], index: 0, kind: input, shape index: {}]
  %s1 = inlined_call_operand.vmem [shape: s32[1,1,128], index: 1, kind: input, shape index: {}]
  %s2 = inlined_call_operand.hbm [shape: f32[64,256], index: 2, kind: input, shape index: {}]
  %s3 = inlined_call_operand.hbm [shape: f32[1,1,128], index: 3, kind: output, shape index: {}]
  %s4 = sld [smem:[#allocation0]]
  $region30: #{tpu_custom_call.1} parent=0
    _
  %s6 = ssub.s32 1, %s4
  %s7 = scalar_select 0, %s6, %s4
  $region1: #{tpu_custom_call.1} parent=0
    #allocation2 [shape = 'u8[512]{0}', space=vmem, size = 0x400, scoped, tag = 'input window, operand 0, single buffered']
    #allocation3 [shape = 's32[1]{0}', space=sflag, size = 0x4, scoped, tag = 'scoped memory for tpu_custom_call.1']
    #allocation4 [shape = 's32[1]{0}', space=sflag, size = 0x4, scoped, tag = 'scoped memory for tpu_custom_call.1']
    #allocation5 [shape = 'u8[65536]{0}', space=vmem, size = 0x10000, scoped, tag = 'input window, operand 2, single buffered']
    #allocation6 [shape = 's32[1]{0}', space=sflag, size = 0x4, scoped, tag = 'scoped memory for tpu_custom_call.1']
    #allocation7 [shape = 'u8[512]{0}', space=vmem, size = 0x400, scoped, tag = 'output window, operand 0, single buffered']
    %8 = vsyncpa [#allocation3], 0
    %9 = vsyncpa [#allocation6], 0
    %10 = vsyncpa [#allocation4], 0
    // Predicated region
    $region2: #{tpu_custom_call.1} parent=1 // pred_check
      _
    $region3: #{tpu_custom_call.1} parent=1 // pred_check_branch
      %12 = sbr.rel (0) target = $region5
    $region4: #{tpu_custom_call.1} parent=1 // pred_region
      %s14 = ssub.s32 16, 16
      %15 = vsyncadd [#allocation3], %s14
      %s17 = sshll.u32 [#allocation2], 4
      %s18 = int_to_ptr.vmem [resolvable:$true] %s17
      %20 = dma.hbm_to_vmem [thread:$0]  %s0, 16, %s18, [#allocation3]
    $region5: #{tpu_custom_call.1} parent=1 // pred_fallthru
      _
    // Predicated region
    $region6: #{tpu_custom_call.1} parent=1 // pred_check
      _
    $region7: #{tpu_custom_call.1} parent=1 // pred_check_branch
      %22 = sbr.rel (0) target = $region9
    $region8: #{tpu_custom_call.1} parent=1 // pred_region
      _
    $region9: #{tpu_custom_call.1} parent=1 // pred_fallthru
      _
    // Predicated region
    $region10: #{tpu_custom_call.1} parent=1 // pred_check
      _
    $region11: #{tpu_custom_call.1} parent=1 // pred_check_branch
      %24 = sbr.rel (0) target = $region13
    $region12: #{tpu_custom_call.1} parent=1 // pred_region
      %s26 = ssub.s32 2048, 2048
      %27 = vsyncadd [#allocation6], %s26
      %s28 = sshll.u32 [#allocation5], 4
      %s29 = int_to_ptr.vmem [resolvable:$true] %s28
      %34 = dma.hbm_to_vmem [thread:$0]  %s2, 2048, %s29, [#allocation6], 256, 256, 16
    $region13: #{tpu_custom_call.1} parent=1 // pred_fallthru
      _
    // Predicated region
    $region14: #{tpu_custom_call.1} parent=1 // pred_check
      _
    $region15: #{tpu_custom_call.1} parent=1 // pred_check_branch
      %36 = sbr.rel (0) target = $region17
    $region16: #{tpu_custom_call.1} parent=1 // pred_region
      %37 = dma.done [#allocation3], 16
    $region17: #{tpu_custom_call.1} parent=1 // pred_fallthru
      _
    // Predicated region
    $region18: #{tpu_custom_call.1} parent=1 // pred_check
      _
    $region19: #{tpu_custom_call.1} parent=1 // pred_check_branch
      %39 = sbr.rel (0) target = $region21
    $region20: #{tpu_custom_call.1} parent=1 // pred_region
      %40 = dma.done [#allocation6], 2048
    $region21: #{tpu_custom_call.1} parent=1 // pred_fallthru
      _
    %v41 = vld [vmem:[#allocation2] sm:$0x1]
    %v42 = vld [vmem:[%s1] sm:$0x1]
    %v43 = vld [vmem:[#allocation5] sm:$0xff]
    %v44 = vld [vmem:[#allocation5 + $0x8] sm:$0xff]
    %v45 = vld [vmem:[#allocation5 + $0x10] sm:$0xff]
    %v46 = vld [vmem:[#allocation5 + $0x18] sm:$0xff]
    %v47 = vld [vmem:[#allocation5 + $0x20] sm:$0xff]
    %v48 = vld [vmem:[#allocation5 + $0x28] sm:$0xff]
    %v49 = vld [vmem:[#allocation5 + $0x30] sm:$0xff]
    %v50 = vld [vmem:[#allocation5 + $0x38] sm:$0xff]
    %v51 = vld [vmem:[#allocation5 + $0x40] sm:$0xff]
    %v52 = vld [vmem:[#allocation5 + $0x48] sm:$0xff]
    %v53 = vld [vmem:[#allocation5 + $0x50] sm:$0xff]
    %v54 = vld [vmem:[#allocation5 + $0x58] sm:$0xff]
    %v55 = vld [vmem:[#allocation5 + $0x60] sm:$0xff]
    %v56 = vld [vmem:[#allocation5 + $0x68] sm:$0xff]
    %v57 = vld [vmem:[#allocation5 + $0x70] sm:$0xff]
    %v58 = vld [vmem:[#allocation5 + $0x78] sm:$0xff]
    %v59 = vlaneseq
    %v60 = vshrl.u32 %v59, 7
    %v61 = vadd.s32 %v60, 8
    %v62 = vadd.s32 %v60, 16
    %v63 = vadd.s32 %v60, 24
    %v64 = vadd.s32 %v60, 32
    %v65 = vadd.s32 %v60, 40
    %v66 = vadd.s32 %v60, 48
    %v67 = vadd.s32 %v60, 56
    %v68 = vadd.s32 %v60, 64
    %v69 = vadd.s32 %v60, 72
    %v70 = vadd.s32 %v60, 80
    %v71 = vadd.s32 %v60, 88
    %v72 = vadd.s32 %v60, 96
    %v73 = vadd.s32 %v60, 104
    %v74 = vadd.s32 %v60, 112
    %v75 = vadd.s32 %v60, 120
    %v76 = vadd.s32 %v60, 128
    %v77 = vadd.s32 %v60, 136
    %v78 = vadd.s32 %v60, 144
    %v79 = vadd.s32 %v60, 152
    %v80 = vadd.s32 %v60, 160
    %v81 = vadd.s32 %v60, 168
    %v82 = vadd.s32 %v60, 176
    %v83 = vadd.s32 %v60, 184
    %v84 = vadd.s32 %v60, 192
    %v85 = vadd.s32 %v60, 200
    %v86 = vadd.s32 %v60, 208
    %v87 = vadd.s32 %v60, 216
    %v88 = vadd.s32 %v60, 224
    %v89 = vadd.s32 %v60, 232
    %v90 = vadd.s32 %v60, 240
    %v91 = vadd.s32 %v60, 248
    %v92 = vlaneseq
    %v93 = vshrl.u32 %v92, 7
    %v94 = vsub.s32 0, %v93
    %v95 = vrot.slane %v41, %v94
    %vm96 = vcmp.eq.s32.totalorder %v60, %v95
    %vm97 = vcmp.eq.s32.totalorder %v61, %v95
    %vm98 = vcmp.eq.s32.totalorder %v62, %v95
    %vm99 = vcmp.eq.s32.totalorder %v63, %v95
    %vm100 = vcmp.eq.s32.totalorder %v64, %v95
    %vm101 = vcmp.eq.s32.totalorder %v65, %v95
    %vm102 = vcmp.eq.s32.totalorder %v66, %v95
    %vm103 = vcmp.eq.s32.totalorder %v67, %v95
    %vm104 = vcmp.eq.s32.totalorder %v68, %v95
    %vm105 = vcmp.eq.s32.totalorder %v69, %v95
    %vm106 = vcmp.eq.s32.totalorder %v70, %v95
    %vm107 = vcmp.eq.s32.totalorder %v71, %v95
    %vm108 = vcmp.eq.s32.totalorder %v72, %v95
    %vm109 = vcmp.eq.s32.totalorder %v73, %v95
    %vm110 = vcmp.eq.s32.totalorder %v74, %v95
    %vm111 = vcmp.eq.s32.totalorder %v75, %v95
    %vm112 = vcmp.eq.s32.totalorder %v76, %v95
    %vm113 = vcmp.eq.s32.totalorder %v77, %v95
    %vm114 = vcmp.eq.s32.totalorder %v78, %v95
    %vm115 = vcmp.eq.s32.totalorder %v79, %v95
    %vm116 = vcmp.eq.s32.totalorder %v80, %v95
    %vm117 = vcmp.eq.s32.totalorder %v81, %v95
    %vm118 = vcmp.eq.s32.totalorder %v82, %v95
    %vm119 = vcmp.eq.s32.totalorder %v83, %v95
    %vm120 = vcmp.eq.s32.totalorder %v84, %v95
    %vm121 = vcmp.eq.s32.totalorder %v85, %v95
    %vm122 = vcmp.eq.s32.totalorder %v86, %v95
    %vm123 = vcmp.eq.s32.totalorder %v87, %v95
    %vm124 = vcmp.eq.s32.totalorder %v88, %v95
    %vm125 = vcmp.eq.s32.totalorder %v89, %v95
    %vm126 = vcmp.eq.s32.totalorder %v90, %v95
    %vm127 = vcmp.eq.s32.totalorder %v91, %v95
    %v128 = vadd.s32 %v42, 128
    %v129 = vlaneseq
    %v130 = vshrl.u32 %v129, 7
    %v131 = vsub.s32 0, %v130
    %v132 = vrot.slane %v128, %v131
    %vm133 = vcmp.eq.s32.totalorder %v60, %v132
    %vm134 = vcmp.eq.s32.totalorder %v61, %v132
    %vm135 = vcmp.eq.s32.totalorder %v62, %v132
    %vm136 = vcmp.eq.s32.totalorder %v63, %v132
    %vm137 = vcmp.eq.s32.totalorder %v64, %v132
    %vm138 = vcmp.eq.s32.totalorder %v65, %v132
    %vm139 = vcmp.eq.s32.totalorder %v66, %v132
    %vm140 = vcmp.eq.s32.totalorder %v67, %v132
    %vm141 = vcmp.eq.s32.totalorder %v68, %v132
    %vm142 = vcmp.eq.s32.totalorder %v69, %v132
    %vm143 = vcmp.eq.s32.totalorder %v70, %v132
    %vm144 = vcmp.eq.s32.totalorder %v71, %v132
    %vm145 = vcmp.eq.s32.totalorder %v72, %v132
    %vm146 = vcmp.eq.s32.totalorder %v73, %v132
    %vm147 = vcmp.eq.s32.totalorder %v74, %v132
    %vm148 = vcmp.eq.s32.totalorder %v75, %v132
    %vm149 = vcmp.eq.s32.totalorder %v76, %v132
    %vm150 = vcmp.eq.s32.totalorder %v77, %v132
    %vm151 = vcmp.eq.s32.totalorder %v78, %v132
    %vm152 = vcmp.eq.s32.totalorder %v79, %v132
    %vm153 = vcmp.eq.s32.totalorder %v80, %v132
    %vm154 = vcmp.eq.s32.totalorder %v81, %v132
    %vm155 = vcmp.eq.s32.totalorder %v82, %v132
    %vm156 = vcmp.eq.s32.totalorder %v83, %v132
    %vm157 = vcmp.eq.s32.totalorder %v84, %v132
    %vm158 = vcmp.eq.s32.totalorder %v85, %v132
    %vm159 = vcmp.eq.s32.totalorder %v86, %v132
    %vm160 = vcmp.eq.s32.totalorder %v87, %v132
    %vm161 = vcmp.eq.s32.totalorder %v88, %v132
    %vm162 = vcmp.eq.s32.totalorder %v89, %v132
    %vm163 = vcmp.eq.s32.totalorder %v90, %v132
    %vm164 = vcmp.eq.s32.totalorder %v91, %v132
    %vm165 = vmor %vm96, %vm133
    %vm166 = vmor %vm97, %vm134
    %vm167 = vmor %vm98, %vm135
    %vm168 = vmor %vm99, %vm136
    %vm169 = vmor %vm100, %vm137
    %vm170 = vmor %vm101, %vm138
    %vm171 = vmor %vm102, %vm139
    %vm172 = vmor %vm103, %vm140
    %vm173 = vmor %vm104, %vm141
    %vm174 = vmor %vm105, %vm142
    %vm175 = vmor %vm106, %vm143
    %vm176 = vmor %vm107, %vm144
    %vm177 = vmor %vm108, %vm145
    %vm178 = vmor %vm109, %vm146
    %vm179 = vmor %vm110, %vm147
    %vm180 = vmor %vm111, %vm148
    %vm181 = vmor %vm112, %vm149
    %vm182 = vmor %vm113, %vm150
    %vm183 = vmor %vm114, %vm151
    %vm184 = vmor %vm115, %vm152
    %vm185 = vmor %vm116, %vm153
    %vm186 = vmor %vm117, %vm154
    %vm187 = vmor %vm118, %vm155
    %vm188 = vmor %vm119, %vm156
    %vm189 = vmor %vm120, %vm157
    %vm190 = vmor %vm121, %vm158
    %vm191 = vmor %vm122, %vm159
    %vm192 = vmor %vm123, %vm160
    %vm193 = vmor %vm124, %vm161
    %vm194 = vmor %vm125, %vm162
    %vm195 = vmor %vm126, %vm163
    %vm196 = vmor %vm127, %vm164
    %v197 = vsel %vm165, 1, 0
    %v198 = vsel %vm166, 1, 0
    %v199 = vsel %vm167, 1, 0
    %v200 = vsel %vm168, 1, 0
    %v201 = vsel %vm169, 1, 0
    %v202 = vsel %vm170, 1, 0
    %v203 = vsel %vm171, 1, 0
    %v204 = vsel %vm172, 1, 0
    %v205 = vsel %vm173, 1, 0
    %v206 = vsel %vm174, 1, 0
    %v207 = vsel %vm175, 1, 0
    %v208 = vsel %vm176, 1, 0
    %v209 = vsel %vm177, 1, 0
    %v210 = vsel %vm178, 1, 0
    %v211 = vsel %vm179, 1, 0
    %v212 = vsel %vm180, 1, 0
    %v213 = vsel %vm181, 1, 0
    %v214 = vsel %vm182, 1, 0
    %v215 = vsel %vm183, 1, 0
    %v216 = vsel %vm184, 1, 0
    %v217 = vsel %vm185, 1, 0
    %v218 = vsel %vm186, 1, 0
    %v219 = vsel %vm187, 1, 0
    %v220 = vsel %vm188, 1, 0
    %v221 = vsel %vm189, 1, 0
    %v222 = vsel %vm190, 1, 0
    %v223 = vsel %vm191, 1, 0
    %v224 = vsel %vm192, 1, 0
    %v225 = vsel %vm193, 1, 0
    %v226 = vsel %vm194, 1, 0
    %v227 = vsel %vm195, 1, 0
    %v228 = vsel %vm196, 1, 0
    %v229 = vcvt.s32.f32 %v197
    %v230 = vcvt.s32.f32 %v198
    %v231 = vcvt.s32.f32 %v199
    %v232 = vcvt.s32.f32 %v200
    %v233 = vcvt.s32.f32 %v201
    %v234 = vcvt.s32.f32 %v202
    %v235 = vcvt.s32.f32 %v203
    %v236 = vcvt.s32.f32 %v204
    %v237 = vcvt.s32.f32 %v205
    %v238 = vcvt.s32.f32 %v206
    %v239 = vcvt.s32.f32 %v207
    %v240 = vcvt.s32.f32 %v208
    %v241 = vcvt.s32.f32 %v209
    %v242 = vcvt.s32.f32 %v210
    %v243 = vcvt.s32.f32 %v211
    %v244 = vcvt.s32.f32 %v212
    %v245 = vcvt.s32.f32 %v213
    %v246 = vcvt.s32.f32 %v214
    %v247 = vcvt.s32.f32 %v215
    %v248 = vcvt.s32.f32 %v216
    %v249 = vcvt.s32.f32 %v217
    %v250 = vcvt.s32.f32 %v218
    %v251 = vcvt.s32.f32 %v219
    %v252 = vcvt.s32.f32 %v220
    %v253 = vcvt.s32.f32 %v221
    %v254 = vcvt.s32.f32 %v222
    %v255 = vcvt.s32.f32 %v223
    %v256 = vcvt.s32.f32 %v224
    %v257 = vcvt.s32.f32 %v225
    %v258 = vcvt.s32.f32 %v226
    %v259 = vcvt.s32.f32 %v227
    %v260 = vcvt.s32.f32 %v228
    %261 = vmatprep.subr.mxu0 0.0
    %v262 = vand.u32 %v244, 4294901760
    %263 = vmatpush1.msra.mxu0 %v262
    %264 = vmatprep.subr.mxu0 0.0
    %v265 = vand.u32 %v243, 4294901760
    %266 = vmatpush1.msra.mxu0 %v265
    %267 = vmatprep.subr.mxu0 0.0
    %v268 = vand.u32 %v242, 4294901760
    %269 = vmatpush1.msra.mxu0 %v268
    %270 = vmatprep.subr.mxu0 0.0
    %v271 = vand.u32 %v241, 4294901760
    %272 = vmatpush1.msra.mxu0 %v271
    %273 = vmatprep.subr.mxu0 0.0
    %v274 = vand.u32 %v240, 4294901760
    %275 = vmatpush1.msra.mxu0 %v274
    %276 = vmatprep.subr.mxu0 0.0
    %v277 = vand.u32 %v239, 4294901760
    %278 = vmatpush1.msra.mxu0 %v277
    %279 = vmatprep.subr.mxu0 0.0
    %v280 = vand.u32 %v238, 4294901760
    %281 = vmatpush1.msra.mxu0 %v280
    %282 = vmatprep.subr.mxu0 0.0
    %v283 = vand.u32 %v237, 4294901760
    %284 = vmatpush1.msra.mxu0 %v283
    %285 = vmatprep.subr.mxu0 0.0
    %v286 = vand.u32 %v236, 4294901760
    %287 = vmatpush1.msra.mxu0 %v286
    %288 = vmatprep.subr.mxu0 0.0
    %v289 = vand.u32 %v235, 4294901760
    %290 = vmatpush1.msra.mxu0 %v289
    %291 = vmatprep.subr.mxu0 0.0
    %v292 = vand.u32 %v234, 4294901760
    %293 = vmatpush1.msra.mxu0 %v292
    %294 = vmatprep.subr.mxu0 0.0
    %v295 = vand.u32 %v233, 4294901760
    %296 = vmatpush1.msra.mxu0 %v295
    %297 = vmatprep.subr.mxu0 0.0
    %v298 = vand.u32 %v232, 4294901760
    %299 = vmatpush1.msra.mxu0 %v298
    %300 = vmatprep.subr.mxu0 0.0
    %v301 = vand.u32 %v231, 4294901760
    %302 = vmatpush1.msra.mxu0 %v301
    %303 = vmatprep.subr.mxu0 0.0
    %v304 = vand.u32 %v230, 4294901760
    %305 = vmatpush1.msra.mxu0 %v304
    %306 = vmatprep.subr.mxu0 0.0
    %v307 = vand.u32 %v229, 4294901760
    %308 = vmatpush1.msra.mxu0 %v307
    %309 = vmatprep.subr.mxu0 0.0
    %v310 = vand.u32 %v260, 4294901760
    %311 = vmatpush2.msra.mxu0 %v310
    %312 = vmatprep.subr.mxu0 0.0
    %v313 = vand.u32 %v259, 4294901760
    %314 = vmatpush2.msra.mxu0 %v313
    %315 = vmatprep.subr.mxu0 0.0
    %v316 = vand.u32 %v258, 4294901760
    %317 = vmatpush2.msra.mxu0 %v316
    %318 = vmatprep.subr.mxu0 0.0
    %v319 = vand.u32 %v257, 4294901760
    %320 = vmatpush2.msra.mxu0 %v319
    %321 = vmatprep.subr.mxu0 0.0
    %v322 = vand.u32 %v256, 4294901760
    %323 = vmatpush2.msra.mxu0 %v322
    %324 = vmatprep.subr.mxu0 0.0
    %v325 = vand.u32 %v255, 4294901760
    %326 = vmatpush2.msra.mxu0 %v325
    %327 = vmatprep.subr.mxu0 0.0
    %v328 = vand.u32 %v254, 4294901760
    %329 = vmatpush2.msra.mxu0 %v328
    %330 = vmatprep.subr.mxu0 0.0
    %v331 = vand.u32 %v253, 4294901760
    %332 = vmatpush2.msra.mxu0 %v331
    %333 = vmatprep.subr.mxu0 0.0
    %v334 = vand.u32 %v252, 4294901760
    %335 = vmatpush2.msra.mxu0 %v334
    %336 = vmatprep.subr.mxu0 0.0
    %v337 = vand.u32 %v251, 4294901760
    %338 = vmatpush2.msra.mxu0 %v337
    %339 = vmatprep.subr.mxu0 0.0
    %v340 = vand.u32 %v250, 4294901760
    %341 = vmatpush2.msra.mxu0 %v340
    %342 = vmatprep.subr.mxu0 0.0
    %v343 = vand.u32 %v249, 4294901760
    %344 = vmatpush2.msra.mxu0 %v343
    %345 = vmatprep.subr.mxu0 0.0
    %v346 = vand.u32 %v248, 4294901760
    %347 = vmatpush2.msra.mxu0 %v346
    %348 = vmatprep.subr.mxu0 0.0
    %v349 = vand.u32 %v247, 4294901760
    %350 = vmatpush2.msra.mxu0 %v349
    %351 = vmatprep.subr.mxu0 0.0
    %v352 = vand.u32 %v246, 4294901760
    %353 = vmatpush2.msra.mxu0 %v352
    %354 = vmatprep.subr.mxu0 0.0
    %v355 = vand.u32 %v245, 4294901760
    %356 = vmatpush2.msra.mxu0 %v355
    %v357 = vand.u32 %v44, 4294901760
    %v358 = vsub.f32 %v44, %v357
    %v359 = vand.u32 %v358, 4294901760
    %v360 = vsub.f32 %v358, %v359
    %v361 = vand.u32 %v360, 4294901760
    %362 = vmatprep.mubr.f32.mxu0 %v361
    %v363 = vand.u32 %v43, 4294901760
    %v364 = vsub.f32 %v43, %v363
    %v365 = vand.u32 %v364, 4294901760
    %v366 = vsub.f32 %v364, %v365
    %v367 = vand.u32 %v366, 4294901760
    %368 = vmatmul.mubr.f32.gmra.mxu0 %v367
    %v369 = vpop.f32.mrf.mxu0
    %v370 = vadd.f32 0.0, %v369
    %v371 = vpop.f32.mrf.mxu0
    %v372 = vand.u32 %v46, 4294901760
    %v373 = vsub.f32 %v46, %v372
    %v374 = vand.u32 %v373, 4294901760
    %v375 = vsub.f32 %v373, %v374
    %v376 = vand.u32 %v375, 4294901760
    %377 = vmatprep.mubr.f32.mxu0 %v376
    %v378 = vand.u32 %v45, 4294901760
    %v379 = vsub.f32 %v45, %v378
    %v380 = vand.u32 %v379, 4294901760
    %v381 = vsub.f32 %v379, %v380
    %v382 = vand.u32 %v381, 4294901760
    %383 = vmatmul.mubr.f32.gmra.mxu0 %v382
    %v384 = vpop.f32.mrf.mxu0
    %v385 = vadd.f32 0.0, %v384
    %v386 = vpop.f32.mrf.mxu0
    %v387 = vand.u32 %v48, 4294901760
    %v388 = vsub.f32 %v48, %v387
    %v389 = vand.u32 %v388, 4294901760
    %v390 = vsub.f32 %v388, %v389
    %v391 = vand.u32 %v390, 4294901760
    %392 = vmatprep.mubr.f32.mxu0 %v391
    %v393 = vand.u32 %v47, 4294901760
    %v394 = vsub.f32 %v47, %v393
    %v395 = vand.u32 %v394, 4294901760
    %v396 = vsub.f32 %v394, %v395
    %v397 = vand.u32 %v396, 4294901760
    %398 = vmatmul.mubr.f32.gmra.mxu0 %v397
    %v399 = vpop.f32.mrf.mxu0
    %v400 = vadd.f32 0.0, %v399
    %v401 = vpop.f32.mrf.mxu0
    %v402 = vand.u32 %v50, 4294901760
    %v403 = vsub.f32 %v50, %v402
    %v404 = vand.u32 %v403, 4294901760
    %v405 = vsub.f32 %v403, %v404
    %v406 = vand.u32 %v405, 4294901760
    %407 = vmatprep.mubr.f32.mxu0 %v406
    %v408 = vand.u32 %v49, 4294901760
    %v409 = vsub.f32 %v49, %v408
    %v410 = vand.u32 %v409, 4294901760
    %v411 = vsub.f32 %v409, %v410
    %v412 = vand.u32 %v411, 4294901760
    %413 = vmatmul.mubr.f32.gmra.mxu0 %v412
    %v414 = vpop.f32.mrf.mxu0
    %v415 = vadd.f32 0.0, %v414
    %v416 = vpop.f32.mrf.mxu0
    %v417 = vand.u32 %v52, 4294901760
    %v418 = vsub.f32 %v52, %v417
    %v419 = vand.u32 %v418, 4294901760
    %v420 = vsub.f32 %v418, %v419
    %v421 = vand.u32 %v420, 4294901760
    %422 = vmatprep.mubr.f32.mxu0 %v421
    %v423 = vand.u32 %v51, 4294901760
    %v424 = vsub.f32 %v51, %v423
    %v425 = vand.u32 %v424, 4294901760
    %v426 = vsub.f32 %v424, %v425
    %v427 = vand.u32 %v426, 4294901760
    %428 = vmatmul.mubr.f32.gmra.mxu0 %v427
    %v429 = vpop.f32.mrf.mxu0
    %v430 = vadd.f32 0.0, %v429
    %v431 = vpop.f32.mrf.mxu0
    %v432 = vand.u32 %v54, 4294901760
    %v433 = vsub.f32 %v54, %v432
    %v434 = vand.u32 %v433, 4294901760
    %v435 = vsub.f32 %v433, %v434
    %v436 = vand.u32 %v435, 4294901760
    %437 = vmatprep.mubr.f32.mxu0 %v436
    %v438 = vand.u32 %v53, 4294901760
    %v439 = vsub.f32 %v53, %v438
    %v440 = vand.u32 %v439, 4294901760
    %v441 = vsub.f32 %v439, %v440
    %v442 = vand.u32 %v441, 4294901760
    %443 = vmatmul.mubr.f32.gmra.mxu0 %v442
    %v444 = vpop.f32.mrf.mxu0
    %v445 = vadd.f32 0.0, %v444
    %v446 = vpop.f32.mrf.mxu0
    %v447 = vand.u32 %v56, 4294901760
    %v448 = vsub.f32 %v56, %v447
    %v449 = vand.u32 %v448, 4294901760
    %v450 = vsub.f32 %v448, %v449
    %v451 = vand.u32 %v450, 4294901760
    %452 = vmatprep.mubr.f32.mxu0 %v451
    %v453 = vand.u32 %v55, 4294901760
    %v454 = vsub.f32 %v55, %v453
    %v455 = vand.u32 %v454, 4294901760
    %v456 = vsub.f32 %v454, %v455
    %v457 = vand.u32 %v456, 4294901760
    %458 = vmatmul.mubr.f32.gmra.mxu0 %v457
    %v459 = vpop.f32.mrf.mxu0
    %v460 = vadd.f32 0.0, %v459
    %v461 = vpop.f32.mrf.mxu0
    %v462 = vand.u32 %v58, 4294901760
    %v463 = vsub.f32 %v58, %v462
    %v464 = vand.u32 %v463, 4294901760
    %v465 = vsub.f32 %v463, %v464
    %v466 = vand.u32 %v465, 4294901760
    %467 = vmatprep.mubr.f32.mxu0 %v466
    %v468 = vand.u32 %v57, 4294901760
    %v469 = vsub.f32 %v57, %v468
    %v470 = vand.u32 %v469, 4294901760
    %v471 = vsub.f32 %v469, %v470
    %v472 = vand.u32 %v471, 4294901760
    %473 = vmatmul.mubr.f32.gmra.mxu0 %v472
    %v474 = vpop.f32.mrf.mxu0
    %v475 = vadd.f32 0.0, %v474
    %v476 = vpop.f32.mrf.mxu0
    %477 = vdwg.mxu0
    %478 = vmatprep.subr.mxu0 0.0
    %v479 = vand.u32 %v244, 4294901760
    %v480 = vsub.f32 %v244, %v479
    %v481 = vand.u32 %v480, 4294901760
    %v482 = vsub.f32 %v480, %v481
    %v483 = vand.u32 %v482, 4294901760
    %484 = vmatpush1.msra.mxu0 %v483
    %485 = vmatprep.subr.mxu0 0.0
    %v486 = vand.u32 %v243, 4294901760
    %v487 = vsub.f32 %v243, %v486
    %v488 = vand.u32 %v487, 4294901760
    %v489 = vsub.f32 %v487, %v488
    %v490 = vand.u32 %v489, 4294901760
    %491 = vmatpush1.msra.mxu0 %v490
    %492 = vmatprep.subr.mxu0 0.0
    %v493 = vand.u32 %v242, 4294901760
    %v494 = vsub.f32 %v242, %v493
    %v495 = vand.u32 %v494, 4294901760
    %v496 = vsub.f32 %v494, %v495
    %v497 = vand.u32 %v496, 4294901760
    %498 = vmatpush1.msra.mxu0 %v497
    %499 = vmatprep.subr.mxu0 0.0
    %v500 = vand.u32 %v241, 4294901760
    %v501 = vsub.f32 %v241, %v500
    %v502 = vand.u32 %v501, 4294901760
    %v503 = vsub.f32 %v501, %v502
    %v504 = vand.u32 %v503, 4294901760
    %505 = vmatpush1.msra.mxu0 %v504
    %506 = vmatprep.subr.mxu0 0.0
    %v507 = vand.u32 %v240, 4294901760
    %v508 = vsub.f32 %v240, %v507
    %v509 = vand.u32 %v508, 4294901760
    %v510 = vsub.f32 %v508, %v509
    %v511 = vand.u32 %v510, 4294901760
    %512 = vmatpush1.msra.mxu0 %v511
    %513 = vmatprep.subr.mxu0 0.0
    %v514 = vand.u32 %v239, 4294901760
    %v515 = vsub.f32 %v239, %v514
    %v516 = vand.u32 %v515, 4294901760
    %v517 = vsub.f32 %v515, %v516
    %v518 = vand.u32 %v517, 4294901760
    %519 = vmatpush1.msra.mxu0 %v518
    %520 = vmatprep.subr.mxu0 0.0
    %v521 = vand.u32 %v238, 4294901760
    %v522 = vsub.f32 %v238, %v521
    %v523 = vand.u32 %v522, 4294901760
    %v524 = vsub.f32 %v522, %v523
    %v525 = vand.u32 %v524, 4294901760
    %526 = vmatpush1.msra.mxu0 %v525
    %527 = vmatprep.subr.mxu0 0.0
    %v528 = vand.u32 %v237, 4294901760
    %v529 = vsub.f32 %v237, %v528
    %v530 = vand.u32 %v529, 4294901760
    %v531 = vsub.f32 %v529, %v530
    %v532 = vand.u32 %v531, 4294901760
    %533 = vmatpush1.msra.mxu0 %v532
    %534 = vmatprep.subr.mxu0 0.0
    %v535 = vand.u32 %v236, 4294901760
    %v536 = vsub.f32 %v236, %v535
    %v537 = vand.u32 %v536, 4294901760
    %v538 = vsub.f32 %v536, %v537
    %v539 = vand.u32 %v538, 4294901760
    %540 = vmatpush1.msra.mxu0 %v539
    %541 = vmatprep.subr.mxu0 0.0
    %v542 = vand.u32 %v235, 4294901760
    %v543 = vsub.f32 %v235, %v542
    %v544 = vand.u32 %v543, 4294901760
    %v545 = vsub.f32 %v543, %v544
    %v546 = vand.u32 %v545, 4294901760
    %547 = vmatpush1.msra.mxu0 %v546
    %548 = vmatprep.subr.mxu0 0.0
    %v549 = vand.u32 %v234, 4294901760
    %v550 = vsub.f32 %v234, %v549
    %v551 = vand.u32 %v550, 4294901760
    %v552 = vsub.f32 %v550, %v551
    %v553 = vand.u32 %v552, 4294901760
    %554 = vmatpush1.msra.mxu0 %v553
    %555 = vmatprep.subr.mxu0 0.0
    %v556 = vand.u32 %v233, 4294901760
    %v557 = vsub.f32 %v233, %v556
    %v558 = vand.u32 %v557, 4294901760
    %v559 = vsub.f32 %v557, %v558
    %v560 = vand.u32 %v559, 4294901760
    %561 = vmatpush1.msra.mxu0 %v560
    %562 = vmatprep.subr.mxu0 0.0
    %v563 = vand.u32 %v232, 4294901760
    %v564 = vsub.f32 %v232, %v563
    %v565 = vand.u32 %v564, 4294901760
    %v566 = vsub.f32 %v564, %v565
    %v567 = vand.u32 %v566, 4294901760
    %568 = vmatpush1.msra.mxu0 %v567
    %569 = vmatprep.subr.mxu0 0.0
    %v570 = vand.u32 %v231, 4294901760
    %v571 = vsub.f32 %v231, %v570
    %v572 = vand.u32 %v571, 4294901760
    %v573 = vsub.f32 %v571, %v572
    %v574 = vand.u32 %v573, 4294901760
    %575 = vmatpush1.msra.mxu0 %v574
    %576 = vmatprep.subr.mxu0 0.0
    %v577 = vand.u32 %v230, 4294901760
    %v578 = vsub.f32 %v230, %v577
    %v579 = vand.u32 %v578, 4294901760
    %v580 = vsub.f32 %v578, %v579
    %v581 = vand.u32 %v580, 4294901760
    %582 = vmatpush1.msra.mxu0 %v581
    %583 = vmatprep.subr.mxu0 0.0
    %v584 = vand.u32 %v229, 4294901760
    %v585 = vsub.f32 %v229, %v584
    %v586 = vand.u32 %v585, 4294901760
    %v587 = vsub.f32 %v585, %v586
    %v588 = vand.u32 %v587, 4294901760
    %589 = vmatpush1.msra.mxu0 %v588
    %590 = vmatprep.subr.mxu0 0.0
    %v591 = vand.u32 %v260, 4294901760
    %v592 = vsub.f32 %v260, %v591
    %v593 = vand.u32 %v592, 4294901760
    %v594 = vsub.f32 %v592, %v593
    %v595 = vand.u32 %v594, 4294901760
    %596 = vmatpush2.msra.mxu0 %v595
    %597 = vmatprep.subr.mxu0 0.0
    %v598 = vand.u32 %v259, 4294901760
    %v599 = vsub.f32 %v259, %v598
    %v600 = vand.u32 %v599, 4294901760
    %v601 = vsub.f32 %v599, %v600
    %v602 = vand.u32 %v601, 4294901760
    %603 = vmatpush2.msra.mxu0 %v602
    %604 = vmatprep.subr.mxu0 0.0
    %v605 = vand.u32 %v258, 4294901760
    %v606 = vsub.f32 %v258, %v605
    %v607 = vand.u32 %v606, 4294901760
    %v608 = vsub.f32 %v606, %v607
    %v609 = vand.u32 %v608, 4294901760
    %610 = vmatpush2.msra.mxu0 %v609
    %611 = vmatprep.subr.mxu0 0.0
    %v612 = vand.u32 %v257, 4294901760
    %v613 = vsub.f32 %v257, %v612
    %v614 = vand.u32 %v613, 4294901760
    %v615 = vsub.f32 %v613, %v614
    %v616 = vand.u32 %v615, 4294901760
    %617 = vmatpush2.msra.mxu0 %v616
    %618 = vmatprep.subr.mxu0 0.0
    %v619 = vand.u32 %v256, 4294901760
    %v620 = vsub.f32 %v256, %v619
    %v621 = vand.u32 %v620, 4294901760
    %v622 = vsub.f32 %v620, %v621
    %v623 = vand.u32 %v622, 4294901760
    %624 = vmatpush2.msra.mxu0 %v623
    %625 = vmatprep.subr.mxu0 0.0
    %v626 = vand.u32 %v255, 4294901760
    %v627 = vsub.f32 %v255, %v626
    %v628 = vand.u32 %v627, 4294901760
    %v629 = vsub.f32 %v627, %v628
    %v630 = vand.u32 %v629, 4294901760
    %631 = vmatpush2.msra.mxu0 %v630
    %632 = vmatprep.subr.mxu0 0.0
    %v633 = vand.u32 %v254, 4294901760
    %v634 = vsub.f32 %v254, %v633
    %v635 = vand.u32 %v634, 4294901760
    %v636 = vsub.f32 %v634, %v635
    %v637 = vand.u32 %v636, 4294901760
    %638 = vmatpush2.msra.mxu0 %v637
    %639 = vmatprep.subr.mxu0 0.0
    %v640 = vand.u32 %v253, 4294901760
    %v641 = vsub.f32 %v253, %v640
    %v642 = vand.u32 %v641, 4294901760
    %v643 = vsub.f32 %v641, %v642
    %v644 = vand.u32 %v643, 4294901760
    %645 = vmatpush2.msra.mxu0 %v644
    %646 = vmatprep.subr.mxu0 0.0
    %v647 = vand.u32 %v252, 4294901760
    %v648 = vsub.f32 %v252, %v647
    %v649 = vand.u32 %v648, 4294901760
    %v650 = vsub.f32 %v648, %v649
    %v651 = vand.u32 %v650, 4294901760
    %652 = vmatpush2.msra.mxu0 %v651
    %653 = vmatprep.subr.mxu0 0.0
    %v654 = vand.u32 %v251, 4294901760
    %v655 = vsub.f32 %v251, %v654
    %v656 = vand.u32 %v655, 4294901760
    %v657 = vsub.f32 %v655, %v656
    %v658 = vand.u32 %v657, 4294901760
    %659 = vmatpush2.msra.mxu0 %v658
    %660 = vmatprep.subr.mxu0 0.0
    %v661 = vand.u32 %v250, 4294901760
    %v662 = vsub.f32 %v250, %v661
    %v663 = vand.u32 %v662, 4294901760
    %v664 = vsub.f32 %v662, %v663
    %v665 = vand.u32 %v664, 4294901760
    %666 = vmatpush2.msra.mxu0 %v665
    %667 = vmatprep.subr.mxu0 0.0
    %v668 = vand.u32 %v249, 4294901760
    %v669 = vsub.f32 %v249, %v668
    %v670 = vand.u32 %v669, 4294901760
    %v671 = vsub.f32 %v669, %v670
    %v672 = vand.u32 %v671, 4294901760
    %673 = vmatpush2.msra.mxu0 %v672
    %674 = vmatprep.subr.mxu0 0.0
    %v675 = vand.u32 %v248, 4294901760
    %v676 = vsub.f32 %v248, %v675
    %v677 = vand.u32 %v676, 4294901760
    %v678 = vsub.f32 %v676, %v677
    %v679 = vand.u32 %v678, 4294901760
    %680 = vmatpush2.msra.mxu0 %v679
    %681 = vmatprep.subr.mxu0 0.0
    %v682 = vand.u32 %v247, 4294901760
    %v683 = vsub.f32 %v247, %v682
    %v684 = vand.u32 %v683, 4294901760
    %v685 = vsub.f32 %v683, %v684
    %v686 = vand.u32 %v685, 4294901760
    %687 = vmatpush2.msra.mxu0 %v686
    %688 = vmatprep.subr.mxu0 0.0
    %v689 = vand.u32 %v246, 4294901760
    %v690 = vsub.f32 %v246, %v689
    %v691 = vand.u32 %v690, 4294901760
    %v692 = vsub.f32 %v690, %v691
    %v693 = vand.u32 %v692, 4294901760
    %694 = vmatpush2.msra.mxu0 %v693
    %695 = vmatprep.subr.mxu0 0.0
    %v696 = vand.u32 %v245, 4294901760
    %v697 = vsub.f32 %v245, %v696
    %v698 = vand.u32 %v697, 4294901760
    %v699 = vsub.f32 %v697, %v698
    %v700 = vand.u32 %v699, 4294901760
    %701 = vmatpush2.msra.mxu0 %v700
    %v702 = vand.u32 %v44, 4294901760
    %703 = vmatprep.mubr.f32.mxu0 %v702
    %v704 = vand.u32 %v43, 4294901760
    %705 = vmatmul.mubr.f32.gmra.mxu0 %v704
    %v706 = vpop.f32.mrf.mxu0
    %v707 = vadd.f32 %v370, %v706
    %v708 = vpop.f32.mrf.mxu0
    %v709 = vand.u32 %v46, 4294901760
    %710 = vmatprep.mubr.f32.mxu0 %v709
    %v711 = vand.u32 %v45, 4294901760
    %712 = vmatmul.mubr.f32.gmra.mxu0 %v711
    %v713 = vpop.f32.mrf.mxu0
    %v714 = vadd.f32 %v385, %v713
    %v715 = vpop.f32.mrf.mxu0
    %v716 = vand.u32 %v48, 4294901760
    %717 = vmatprep.mubr.f32.mxu0 %v716
    %v718 = vand.u32 %v47, 4294901760
    %719 = vmatmul.mubr.f32.gmra.mxu0 %v718
    %v720 = vpop.f32.mrf.mxu0
    %v721 = vadd.f32 %v400, %v720
    %v722 = vpop.f32.mrf.mxu0
    %v723 = vand.u32 %v50, 4294901760
    %724 = vmatprep.mubr.f32.mxu0 %v723
    %v725 = vand.u32 %v49, 4294901760
    %726 = vmatmul.mubr.f32.gmra.mxu0 %v725
    %v727 = vpop.f32.mrf.mxu0
    %v728 = vadd.f32 %v415, %v727
    %v729 = vpop.f32.mrf.mxu0
    %v730 = vand.u32 %v52, 4294901760
    %731 = vmatprep.mubr.f32.mxu0 %v730
    %v732 = vand.u32 %v51, 4294901760
    %733 = vmatmul.mubr.f32.gmra.mxu0 %v732
    %v734 = vpop.f32.mrf.mxu0
    %v735 = vadd.f32 %v430, %v734
    %v736 = vpop.f32.mrf.mxu0
    %v737 = vand.u32 %v54, 4294901760
    %738 = vmatprep.mubr.f32.mxu0 %v737
    %v739 = vand.u32 %v53, 4294901760
    %740 = vmatmul.mubr.f32.gmra.mxu0 %v739
    %v741 = vpop.f32.mrf.mxu0
    %v742 = vadd.f32 %v445, %v741
    %v743 = vpop.f32.mrf.mxu0
    %v744 = vand.u32 %v56, 4294901760
    %745 = vmatprep.mubr.f32.mxu0 %v744
    %v746 = vand.u32 %v55, 4294901760
    %747 = vmatmul.mubr.f32.gmra.mxu0 %v746
    %v748 = vpop.f32.mrf.mxu0
    %v749 = vadd.f32 %v460, %v748
    %v750 = vpop.f32.mrf.mxu0
    %v751 = vand.u32 %v58, 4294901760
    %752 = vmatprep.mubr.f32.mxu0 %v751
    %v753 = vand.u32 %v57, 4294901760
    %754 = vmatmul.mubr.f32.gmra.mxu0 %v753
    %v755 = vpop.f32.mrf.mxu0
    %v756 = vadd.f32 %v475, %v755
    %v757 = vpop.f32.mrf.mxu0
    %758 = vdwg.mxu0
    %759 = vmatprep.subr.mxu0 0.0
    %v760 = vand.u32 %v244, 4294901760
    %v761 = vsub.f32 %v244, %v760
    %762 = vmatpush1.msra.mxu0 %v761
    %763 = vmatprep.subr.mxu0 0.0
    %v764 = vand.u32 %v243, 4294901760
    %v765 = vsub.f32 %v243, %v764
    %766 = vmatpush1.msra.mxu0 %v765
    %767 = vmatprep.subr.mxu0 0.0
    %v768 = vand.u32 %v242, 4294901760
    %v769 = vsub.f32 %v242, %v768
    %770 = vmatpush1.msra.mxu0 %v769
    %771 = vmatprep.subr.mxu0 0.0
    %v772 = vand.u32 %v241, 4294901760
    %v773 = vsub.f32 %v241, %v772
    %774 = vmatpush1.msra.mxu0 %v773
    %775 = vmatprep.subr.mxu0 0.0
    %v776 = vand.u32 %v240, 4294901760
    %v777 = vsub.f32 %v240, %v776
    %778 = vmatpush1.msra.mxu0 %v777
    %779 = vmatprep.subr.mxu0 0.0
    %v780 = vand.u32 %v239, 4294901760
    %v781 = vsub.f32 %v239, %v780
    %782 = vmatpush1.msra.mxu0 %v781
    %783 = vmatprep.subr.mxu0 0.0
    %v784 = vand.u32 %v238, 4294901760
    %v785 = vsub.f32 %v238, %v784
    %786 = vmatpush1.msra.mxu0 %v785
    %787 = vmatprep.subr.mxu0 0.0
    %v788 = vand.u32 %v237, 4294901760
    %v789 = vsub.f32 %v237, %v788
    %790 = vmatpush1.msra.mxu0 %v789
    %791 = vmatprep.subr.mxu0 0.0
    %v792 = vand.u32 %v236, 4294901760
    %v793 = vsub.f32 %v236, %v792
    %794 = vmatpush1.msra.mxu0 %v793
    %795 = vmatprep.subr.mxu0 0.0
    %v796 = vand.u32 %v235, 4294901760
    %v797 = vsub.f32 %v235, %v796
    %798 = vmatpush1.msra.mxu0 %v797
    %799 = vmatprep.subr.mxu0 0.0
    %v800 = vand.u32 %v234, 4294901760
    %v801 = vsub.f32 %v234, %v800
    %802 = vmatpush1.msra.mxu0 %v801
    %803 = vmatprep.subr.mxu0 0.0
    %v804 = vand.u32 %v233, 4294901760
    %v805 = vsub.f32 %v233, %v804
    %806 = vmatpush1.msra.mxu0 %v805
    %807 = vmatprep.subr.mxu0 0.0
    %v808 = vand.u32 %v232, 4294901760
    %v809 = vsub.f32 %v232, %v808
    %810 = vmatpush1.msra.mxu0 %v809
    %811 = vmatprep.subr.mxu0 0.0
    %v812 = vand.u32 %v231, 4294901760
    %v813 = vsub.f32 %v231, %v812
    %814 = vmatpush1.msra.mxu0 %v813
    %815 = vmatprep.subr.mxu0 0.0
    %v816 = vand.u32 %v230, 4294901760
    %v817 = vsub.f32 %v230, %v816
    %818 = vmatpush1.msra.mxu0 %v817
    %819 = vmatprep.subr.mxu0 0.0
    %v820 = vand.u32 %v229, 4294901760
    %v821 = vsub.f32 %v229, %v820
    %822 = vmatpush1.msra.mxu0 %v821
    %823 = vmatprep.subr.mxu0 0.0
    %v824 = vand.u32 %v260, 4294901760
    %v825 = vsub.f32 %v260, %v824
    %826 = vmatpush2.msra.mxu0 %v825
    %827 = vmatprep.subr.mxu0 0.0
    %v828 = vand.u32 %v259, 4294901760
    %v829 = vsub.f32 %v259, %v828
    %830 = vmatpush2.msra.mxu0 %v829
    %831 = vmatprep.subr.mxu0 0.0
    %v832 = vand.u32 %v258, 4294901760
    %v833 = vsub.f32 %v258, %v832
    %834 = vmatpush2.msra.mxu0 %v833
    %835 = vmatprep.subr.mxu0 0.0
    %v836 = vand.u32 %v257, 4294901760
    %v837 = vsub.f32 %v257, %v836
    %838 = vmatpush2.msra.mxu0 %v837
    %839 = vmatprep.subr.mxu0 0.0
    %v840 = vand.u32 %v256, 4294901760
    %v841 = vsub.f32 %v256, %v840
    %842 = vmatpush2.msra.mxu0 %v841
    %843 = vmatprep.subr.mxu0 0.0
    %v844 = vand.u32 %v255, 4294901760
    %v845 = vsub.f32 %v255, %v844
    %846 = vmatpush2.msra.mxu0 %v845
    %847 = vmatprep.subr.mxu0 0.0
    %v848 = vand.u32 %v254, 4294901760
    %v849 = vsub.f32 %v254, %v848
    %850 = vmatpush2.msra.mxu0 %v849
    %851 = vmatprep.subr.mxu0 0.0
    %v852 = vand.u32 %v253, 4294901760
    %v853 = vsub.f32 %v253, %v852
    %854 = vmatpush2.msra.mxu0 %v853
    %855 = vmatprep.subr.mxu0 0.0
    %v856 = vand.u32 %v252, 4294901760
    %v857 = vsub.f32 %v252, %v856
    %858 = vmatpush2.msra.mxu0 %v857
    %859 = vmatprep.subr.mxu0 0.0
    %v860 = vand.u32 %v251, 4294901760
    %v861 = vsub.f32 %v251, %v860
    %862 = vmatpush2.msra.mxu0 %v861
    %863 = vmatprep.subr.mxu0 0.0
    %v864 = vand.u32 %v250, 4294901760
    %v865 = vsub.f32 %v250, %v864
    %866 = vmatpush2.msra.mxu0 %v865
    %867 = vmatprep.subr.mxu0 0.0
    %v868 = vand.u32 %v249, 4294901760
    %v869 = vsub.f32 %v249, %v868
    %870 = vmatpush2.msra.mxu0 %v869
    %871 = vmatprep.subr.mxu0 0.0
    %v872 = vand.u32 %v248, 4294901760
    %v873 = vsub.f32 %v248, %v872
    %874 = vmatpush2.msra.mxu0 %v873
    %875 = vmatprep.subr.mxu0 0.0
    %v876 = vand.u32 %v247, 4294901760
    %v877 = vsub.f32 %v247, %v876
    %878 = vmatpush2.msra.mxu0 %v877
    %879 = vmatprep.subr.mxu0 0.0
    %v880 = vand.u32 %v246, 4294901760
    %v881 = vsub.f32 %v246, %v880
    %882 = vmatpush2.msra.mxu0 %v881
    %883 = vmatprep.subr.mxu0 0.0
    %v884 = vand.u32 %v245, 4294901760
    %v885 = vsub.f32 %v245, %v884
    %886 = vmatpush2.msra.mxu0 %v885
    %v887 = vand.u32 %v44, 4294901760
    %v888 = vsub.f32 %v44, %v887
    %889 = vmatprep.mubr.f32.mxu0 %v888
    %v890 = vand.u32 %v43, 4294901760
    %v891 = vsub.f32 %v43, %v890
    %892 = vmatmul.mubr.f32.gmra.mxu0 %v891
    %v893 = vpop.f32.mrf.mxu0
    %v894 = vadd.f32 %v707, %v893
    %v895 = vpop.f32.mrf.mxu0
    %v896 = vand.u32 %v46, 4294901760
    %v897 = vsub.f32 %v46, %v896
    %898 = vmatprep.mubr.f32.mxu0 %v897
    %v899 = vand.u32 %v45, 4294901760
    %v900 = vsub.f32 %v45, %v899
    %901 = vmatmul.mubr.f32.gmra.mxu0 %v900
    %v902 = vpop.f32.mrf.mxu0
    %v903 = vadd.f32 %v714, %v902
    %v904 = vpop.f32.mrf.mxu0
    %v905 = vand.u32 %v48, 4294901760
    %v906 = vsub.f32 %v48, %v905
    %907 = vmatprep.mubr.f32.mxu0 %v906
    %v908 = vand.u32 %v47, 4294901760
    %v909 = vsub.f32 %v47, %v908
    %910 = vmatmul.mubr.f32.gmra.mxu0 %v909
    %v911 = vpop.f32.mrf.mxu0
    %v912 = vadd.f32 %v721, %v911
    %v913 = vpop.f32.mrf.mxu0
    %v914 = vand.u32 %v50, 4294901760
    %v915 = vsub.f32 %v50, %v914
    %916 = vmatprep.mubr.f32.mxu0 %v915
    %v917 = vand.u32 %v49, 4294901760
    %v918 = vsub.f32 %v49, %v917
    %919 = vmatmul.mubr.f32.gmra.mxu0 %v918
    %v920 = vpop.f32.mrf.mxu0
    %v921 = vadd.f32 %v728, %v920
    %v922 = vpop.f32.mrf.mxu0
    %v923 = vand.u32 %v52, 4294901760
    %v924 = vsub.f32 %v52, %v923
    %925 = vmatprep.mubr.f32.mxu0 %v924
    %v926 = vand.u32 %v51, 4294901760
    %v927 = vsub.f32 %v51, %v926
    %928 = vmatmul.mubr.f32.gmra.mxu0 %v927
    %v929 = vpop.f32.mrf.mxu0
    %v930 = vadd.f32 %v735, %v929
    %v931 = vpop.f32.mrf.mxu0
    %v932 = vand.u32 %v54, 4294901760
    %v933 = vsub.f32 %v54, %v932
    %934 = vmatprep.mubr.f32.mxu0 %v933
    %v935 = vand.u32 %v53, 4294901760
    %v936 = vsub.f32 %v53, %v935
    %937 = vmatmul.mubr.f32.gmra.mxu0 %v936
    %v938 = vpop.f32.mrf.mxu0
    %v939 = vadd.f32 %v742, %v938
    %v940 = vpop.f32.mrf.mxu0
    %v941 = vand.u32 %v56, 4294901760
    %v942 = vsub.f32 %v56, %v941
    %943 = vmatprep.mubr.f32.mxu0 %v942
    %v944 = vand.u32 %v55, 4294901760
    %v945 = vsub.f32 %v55, %v944
    %946 = vmatmul.mubr.f32.gmra.mxu0 %v945
    %v947 = vpop.f32.mrf.mxu0
    %v948 = vadd.f32 %v749, %v947
    %v949 = vpop.f32.mrf.mxu0
    %v950 = vand.u32 %v58, 4294901760
    %v951 = vsub.f32 %v58, %v950
    %952 = vmatprep.mubr.f32.mxu0 %v951
    %v953 = vand.u32 %v57, 4294901760
    %v954 = vsub.f32 %v57, %v953
    %955 = vmatmul.mubr.f32.gmra.mxu0 %v954
    %v956 = vpop.f32.mrf.mxu0
    %v957 = vadd.f32 %v756, %v956
    %v958 = vpop.f32.mrf.mxu0
    %959 = vdwg.mxu0
    %960 = vmatprep.subr.mxu0 0.0
    %v961 = vand.u32 %v244, 4294901760
    %962 = vmatpush1.msra.mxu0 %v961
    %963 = vmatprep.subr.mxu0 0.0
    %v964 = vand.u32 %v243, 4294901760
    %965 = vmatpush1.msra.mxu0 %v964
    %966 = vmatprep.subr.mxu0 0.0
    %v967 = vand.u32 %v242, 4294901760
    %968 = vmatpush1.msra.mxu0 %v967
    %969 = vmatprep.subr.mxu0 0.0
    %v970 = vand.u32 %v241, 4294901760
    %971 = vmatpush1.msra.mxu0 %v970
    %972 = vmatprep.subr.mxu0 0.0
    %v973 = vand.u32 %v240, 4294901760
    %974 = vmatpush1.msra.mxu0 %v973
    %975 = vmatprep.subr.mxu0 0.0
    %v976 = vand.u32 %v239, 4294901760
    %977 = vmatpush1.msra.mxu0 %v976
    %978 = vmatprep.subr.mxu0 0.0
    %v979 = vand.u32 %v238, 4294901760
    %980 = vmatpush1.msra.mxu0 %v979
    %981 = vmatprep.subr.mxu0 0.0
    %v982 = vand.u32 %v237, 4294901760
    %983 = vmatpush1.msra.mxu0 %v982
    %984 = vmatprep.subr.mxu0 0.0
    %v985 = vand.u32 %v236, 4294901760
    %986 = vmatpush1.msra.mxu0 %v985
    %987 = vmatprep.subr.mxu0 0.0
    %v988 = vand.u32 %v235, 4294901760
    %989 = vmatpush1.msra.mxu0 %v988
    %990 = vmatprep.subr.mxu0 0.0
    %v991 = vand.u32 %v234, 4294901760
    %992 = vmatpush1.msra.mxu0 %v991
    %993 = vmatprep.subr.mxu0 0.0
    %v994 = vand.u32 %v233, 4294901760
    %995 = vmatpush1.msra.mxu0 %v994
    %996 = vmatprep.subr.mxu0 0.0
    %v997 = vand.u32 %v232, 4294901760
    %998 = vmatpush1.msra.mxu0 %v997
    %999 = vmatprep.subr.mxu0 0.0
    %v1000 = vand.u32 %v231, 4294901760
    %1001 = vmatpush1.msra.mxu0 %v1000
    %1002 = vmatprep.subr.mxu0 0.0
    %v1003 = vand.u32 %v230, 4294901760
    %1004 = vmatpush1.msra.mxu0 %v1003
    %1005 = vmatprep.subr.mxu0 0.0
    %v1006 = vand.u32 %v229, 4294901760
    %1007 = vmatpush1.msra.mxu0 %v1006
    %1008 = vmatprep.subr.mxu0 0.0
    %v1009 = vand.u32 %v260, 4294901760
    %1010 = vmatpush2.msra.mxu0 %v1009
    %1011 = vmatprep.subr.mxu0 0.0
    %v1012 = vand.u32 %v259, 4294901760
    %1013 = vmatpush2.msra.mxu0 %v1012
    %1014 = vmatprep.subr.mxu0 0.0
    %v1015 = vand.u32 %v258, 4294901760
    %1016 = vmatpush2.msra.mxu0 %v1015
    %1017 = vmatprep.subr.mxu0 0.0
    %v1018 = vand.u32 %v257, 4294901760
    %1019 = vmatpush2.msra.mxu0 %v1018
    %1020 = vmatprep.subr.mxu0 0.0
    %v1021 = vand.u32 %v256, 4294901760
    %1022 = vmatpush2.msra.mxu0 %v1021
    %1023 = vmatprep.subr.mxu0 0.0
    %v1024 = vand.u32 %v255, 4294901760
    %1025 = vmatpush2.msra.mxu0 %v1024
    %1026 = vmatprep.subr.mxu0 0.0
    %v1027 = vand.u32 %v254, 4294901760
    %1028 = vmatpush2.msra.mxu0 %v1027
    %1029 = vmatprep.subr.mxu0 0.0
    %v1030 = vand.u32 %v253, 4294901760
    %1031 = vmatpush2.msra.mxu0 %v1030
    %1032 = vmatprep.subr.mxu0 0.0
    %v1033 = vand.u32 %v252, 4294901760
    %1034 = vmatpush2.msra.mxu0 %v1033
    %1035 = vmatprep.subr.mxu0 0.0
    %v1036 = vand.u32 %v251, 4294901760
    %1037 = vmatpush2.msra.mxu0 %v1036
    %1038 = vmatprep.subr.mxu0 0.0
    %v1039 = vand.u32 %v250, 4294901760
    %1040 = vmatpush2.msra.mxu0 %v1039
    %1041 = vmatprep.subr.mxu0 0.0
    %v1042 = vand.u32 %v249, 4294901760
    %1043 = vmatpush2.msra.mxu0 %v1042
    %1044 = vmatprep.subr.mxu0 0.0
    %v1045 = vand.u32 %v248, 4294901760
    %1046 = vmatpush2.msra.mxu0 %v1045
    %1047 = vmatprep.subr.mxu0 0.0
    %v1048 = vand.u32 %v247, 4294901760
    %1049 = vmatpush2.msra.mxu0 %v1048
    %1050 = vmatprep.subr.mxu0 0.0
    %v1051 = vand.u32 %v246, 4294901760
    %1052 = vmatpush2.msra.mxu0 %v1051
    %1053 = vmatprep.subr.mxu0 0.0
    %v1054 = vand.u32 %v245, 4294901760
    %1055 = vmatpush2.msra.mxu0 %v1054
    %v1056 = vand.u32 %v44, 4294901760
    %v1057 = vsub.f32 %v44, %v1056
    %v1058 = vand.u32 %v1057, 4294901760
    %1059 = vmatprep.mubr.f32.mxu0 %v1058
    %v1060 = vand.u32 %v43, 4294901760
    %v1061 = vsub.f32 %v43, %v1060
    %v1062 = vand.u32 %v1061, 4294901760
    %1063 = vmatmul.mubr.f32.gmra.mxu0 %v1062
    %v1064 = vpop.f32.mrf.mxu0
    %v1065 = vadd.f32 %v894, %v1064
    %v1066 = vpop.f32.mrf.mxu0
    %v1067 = vand.u32 %v46, 4294901760
    %v1068 = vsub.f32 %v46, %v1067
    %v1069 = vand.u32 %v1068, 4294901760
    %1070 = vmatprep.mubr.f32.mxu0 %v1069
    %v1071 = vand.u32 %v45, 4294901760
    %v1072 = vsub.f32 %v45, %v1071
    %v1073 = vand.u32 %v1072, 4294901760
    %1074 = vmatmul.mubr.f32.gmra.mxu0 %v1073
    %v1075 = vpop.f32.mrf.mxu0
    %v1076 = vadd.f32 %v903, %v1075
    %v1077 = vpop.f32.mrf.mxu0
    %v1078 = vand.u32 %v48, 4294901760
    %v1079 = vsub.f32 %v48, %v1078
    %v1080 = vand.u32 %v1079, 4294901760
    %1081 = vmatprep.mubr.f32.mxu0 %v1080
    %v1082 = vand.u32 %v47, 4294901760
    %v1083 = vsub.f32 %v47, %v1082
    %v1084 = vand.u32 %v1083, 4294901760
    %1085 = vmatmul.mubr.f32.gmra.mxu0 %v1084
    %v1086 = vpop.f32.mrf.mxu0
    %v1087 = vadd.f32 %v912, %v1086
    %v1088 = vpop.f32.mrf.mxu0
    %v1089 = vand.u32 %v50, 4294901760
    %v1090 = vsub.f32 %v50, %v1089
    %v1091 = vand.u32 %v1090, 4294901760
    %1092 = vmatprep.mubr.f32.mxu0 %v1091
    %v1093 = vand.u32 %v49, 4294901760
    %v1094 = vsub.f32 %v49, %v1093
    %v1095 = vand.u32 %v1094, 4294901760
    %1096 = vmatmul.mubr.f32.gmra.mxu0 %v1095
    %v1097 = vpop.f32.mrf.mxu0
    %v1098 = vadd.f32 %v921, %v1097
    %v1099 = vpop.f32.mrf.mxu0
    %v1100 = vand.u32 %v52, 4294901760
    %v1101 = vsub.f32 %v52, %v1100
    %v1102 = vand.u32 %v1101, 4294901760
    %1103 = vmatprep.mubr.f32.mxu0 %v1102
    %v1104 = vand.u32 %v51, 4294901760
    %v1105 = vsub.f32 %v51, %v1104
    %v1106 = vand.u32 %v1105, 4294901760
    %1107 = vmatmul.mubr.f32.gmra.mxu0 %v1106
    %v1108 = vpop.f32.mrf.mxu0
    %v1109 = vadd.f32 %v930, %v1108
    %v1110 = vpop.f32.mrf.mxu0
    %v1111 = vand.u32 %v54, 4294901760
    %v1112 = vsub.f32 %v54, %v1111
    %v1113 = vand.u32 %v1112, 4294901760
    %1114 = vmatprep.mubr.f32.mxu0 %v1113
    %v1115 = vand.u32 %v53, 4294901760
    %v1116 = vsub.f32 %v53, %v1115
    %v1117 = vand.u32 %v1116, 4294901760
    %1118 = vmatmul.mubr.f32.gmra.mxu0 %v1117
    %v1119 = vpop.f32.mrf.mxu0
    %v1120 = vadd.f32 %v939, %v1119
    %v1121 = vpop.f32.mrf.mxu0
    %v1122 = vand.u32 %v56, 4294901760
    %v1123 = vsub.f32 %v56, %v1122
    %v1124 = vand.u32 %v1123, 4294901760
    %1125 = vmatprep.mubr.f32.mxu0 %v1124
    %v1126 = vand.u32 %v55, 4294901760
    %v1127 = vsub.f32 %v55, %v1126
    %v1128 = vand.u32 %v1127, 4294901760
    %1129 = vmatmul.mubr.f32.gmra.mxu0 %v1128
    %v1130 = vpop.f32.mrf.mxu0
    %v1131 = vadd.f32 %v948, %v1130
    %v1132 = vpop.f32.mrf.mxu0
    %v1133 = vand.u32 %v58, 4294901760
    %v1134 = vsub.f32 %v58, %v1133
    %v1135 = vand.u32 %v1134, 4294901760
    %1136 = vmatprep.mubr.f32.mxu0 %v1135
    %v1137 = vand.u32 %v57, 4294901760
    %v1138 = vsub.f32 %v57, %v1137
    %v1139 = vand.u32 %v1138, 4294901760
    %1140 = vmatmul.mubr.f32.gmra.mxu0 %v1139
    %v1141 = vpop.f32.mrf.mxu0
    %v1142 = vadd.f32 %v957, %v1141
    %v1143 = vpop.f32.mrf.mxu0
    %1144 = vdwg.mxu0
    %1145 = vmatprep.subr.mxu0 0.0
    %v1146 = vand.u32 %v244, 4294901760
    %v1147 = vsub.f32 %v244, %v1146
    %v1148 = vand.u32 %v1147, 4294901760
    %1149 = vmatpush1.msra.mxu0 %v1148
    %1150 = vmatprep.subr.mxu0 0.0
    %v1151 = vand.u32 %v243, 4294901760
    %v1152 = vsub.f32 %v243, %v1151
    %v1153 = vand.u32 %v1152, 4294901760
    %1154 = vmatpush1.msra.mxu0 %v1153
    %1155 = vmatprep.subr.mxu0 0.0
    %v1156 = vand.u32 %v242, 4294901760
    %v1157 = vsub.f32 %v242, %v1156
    %v1158 = vand.u32 %v1157, 4294901760
    %1159 = vmatpush1.msra.mxu0 %v1158
    %1160 = vmatprep.subr.mxu0 0.0
    %v1161 = vand.u32 %v241, 4294901760
    %v1162 = vsub.f32 %v241, %v1161
    %v1163 = vand.u32 %v1162, 4294901760
    %1164 = vmatpush1.msra.mxu0 %v1163
    %1165 = vmatprep.subr.mxu0 0.0
    %v1166 = vand.u32 %v240, 4294901760
    %v1167 = vsub.f32 %v240, %v1166
    %v1168 = vand.u32 %v1167, 4294901760
    %1169 = vmatpush1.msra.mxu0 %v1168
    %1170 = vmatprep.subr.mxu0 0.0
    %v1171 = vand.u32 %v239, 4294901760
    %v1172 = vsub.f32 %v239, %v1171
    %v1173 = vand.u32 %v1172, 4294901760
    %1174 = vmatpush1.msra.mxu0 %v1173
    %1175 = vmatprep.subr.mxu0 0.0
    %v1176 = vand.u32 %v238, 4294901760
    %v1177 = vsub.f32 %v238, %v1176
    %v1178 = vand.u32 %v1177, 4294901760
    %1179 = vmatpush1.msra.mxu0 %v1178
    %1180 = vmatprep.subr.mxu0 0.0
    %v1181 = vand.u32 %v237, 4294901760
    %v1182 = vsub.f32 %v237, %v1181
    %v1183 = vand.u32 %v1182, 4294901760
    %1184 = vmatpush1.msra.mxu0 %v1183
    %1185 = vmatprep.subr.mxu0 0.0
    %v1186 = vand.u32 %v236, 4294901760
    %v1187 = vsub.f32 %v236, %v1186
    %v1188 = vand.u32 %v1187, 4294901760
    %1189 = vmatpush1.msra.mxu0 %v1188
    %1190 = vmatprep.subr.mxu0 0.0
    %v1191 = vand.u32 %v235, 4294901760
    %v1192 = vsub.f32 %v235, %v1191
    %v1193 = vand.u32 %v1192, 4294901760
    %1194 = vmatpush1.msra.mxu0 %v1193
    %1195 = vmatprep.subr.mxu0 0.0
    %v1196 = vand.u32 %v234, 4294901760
    %v1197 = vsub.f32 %v234, %v1196
    %v1198 = vand.u32 %v1197, 4294901760
    %1199 = vmatpush1.msra.mxu0 %v1198
    %1200 = vmatprep.subr.mxu0 0.0
    %v1201 = vand.u32 %v233, 4294901760
    %v1202 = vsub.f32 %v233, %v1201
    %v1203 = vand.u32 %v1202, 4294901760
    %1204 = vmatpush1.msra.mxu0 %v1203
    %1205 = vmatprep.subr.mxu0 0.0
    %v1206 = vand.u32 %v232, 4294901760
    %v1207 = vsub.f32 %v232, %v1206
    %v1208 = vand.u32 %v1207, 4294901760
    %1209 = vmatpush1.msra.mxu0 %v1208
    %1210 = vmatprep.subr.mxu0 0.0
    %v1211 = vand.u32 %v231, 4294901760
    %v1212 = vsub.f32 %v231, %v1211
    %v1213 = vand.u32 %v1212, 4294901760
    %1214 = vmatpush1.msra.mxu0 %v1213
    %1215 = vmatprep.subr.mxu0 0.0
    %v1216 = vand.u32 %v230, 4294901760
    %v1217 = vsub.f32 %v230, %v1216
    %v1218 = vand.u32 %v1217, 4294901760
    %1219 = vmatpush1.msra.mxu0 %v1218
    %1220 = vmatprep.subr.mxu0 0.0
    %v1221 = vand.u32 %v229, 4294901760
    %v1222 = vsub.f32 %v229, %v1221
    %v1223 = vand.u32 %v1222, 4294901760
    %1224 = vmatpush1.msra.mxu0 %v1223
    %1225 = vmatprep.subr.mxu0 0.0
    %v1226 = vand.u32 %v260, 4294901760
    %v1227 = vsub.f32 %v260, %v1226
    %v1228 = vand.u32 %v1227, 4294901760
    %1229 = vmatpush2.msra.mxu0 %v1228
    %1230 = vmatprep.subr.mxu0 0.0
    %v1231 = vand.u32 %v259, 4294901760
    %v1232 = vsub.f32 %v259, %v1231
    %v1233 = vand.u32 %v1232, 4294901760
    %1234 = vmatpush2.msra.mxu0 %v1233
    %1235 = vmatprep.subr.mxu0 0.0
    %v1236 = vand.u32 %v258, 4294901760
    %v1237 = vsub.f32 %v258, %v1236
    %v1238 = vand.u32 %v1237, 4294901760
    %1239 = vmatpush2.msra.mxu0 %v1238
    %1240 = vmatprep.subr.mxu0 0.0
    %v1241 = vand.u32 %v257, 4294901760
    %v1242 = vsub.f32 %v257, %v1241
    %v1243 = vand.u32 %v1242, 4294901760
    %1244 = vmatpush2.msra.mxu0 %v1243
    %1245 = vmatprep.subr.mxu0 0.0
    %v1246 = vand.u32 %v256, 4294901760
    %v1247 = vsub.f32 %v256, %v1246
    %v1248 = vand.u32 %v1247, 4294901760
    %1249 = vmatpush2.msra.mxu0 %v1248
    %1250 = vmatprep.subr.mxu0 0.0
    %v1251 = vand.u32 %v255, 4294901760
    %v1252 = vsub.f32 %v255, %v1251
    %v1253 = vand.u32 %v1252, 4294901760
    %1254 = vmatpush2.msra.mxu0 %v1253
    %1255 = vmatprep.subr.mxu0 0.0
    %v1256 = vand.u32 %v254, 4294901760
    %v1257 = vsub.f32 %v254, %v1256
    %v1258 = vand.u32 %v1257, 4294901760
    %1259 = vmatpush2.msra.mxu0 %v1258
    %1260 = vmatprep.subr.mxu0 0.0
    %v1261 = vand.u32 %v253, 4294901760
    %v1262 = vsub.f32 %v253, %v1261
    %v1263 = vand.u32 %v1262, 4294901760
    %1264 = vmatpush2.msra.mxu0 %v1263
    %1265 = vmatprep.subr.mxu0 0.0
    %v1266 = vand.u32 %v252, 4294901760
    %v1267 = vsub.f32 %v252, %v1266
    %v1268 = vand.u32 %v1267, 4294901760
    %1269 = vmatpush2.msra.mxu0 %v1268
    %1270 = vmatprep.subr.mxu0 0.0
    %v1271 = vand.u32 %v251, 4294901760
    %v1272 = vsub.f32 %v251, %v1271
    %v1273 = vand.u32 %v1272, 4294901760
    %1274 = vmatpush2.msra.mxu0 %v1273
    %1275 = vmatprep.subr.mxu0 0.0
    %v1276 = vand.u32 %v250, 4294901760
    %v1277 = vsub.f32 %v250, %v1276
    %v1278 = vand.u32 %v1277, 4294901760
    %1279 = vmatpush2.msra.mxu0 %v1278
    %1280 = vmatprep.subr.mxu0 0.0
    %v1281 = vand.u32 %v249, 4294901760
    %v1282 = vsub.f32 %v249, %v1281
    %v1283 = vand.u32 %v1282, 4294901760
    %1284 = vmatpush2.msra.mxu0 %v1283
    %1285 = vmatprep.subr.mxu0 0.0
    %v1286 = vand.u32 %v248, 4294901760
    %v1287 = vsub.f32 %v248, %v1286
    %v1288 = vand.u32 %v1287, 4294901760
    %1289 = vmatpush2.msra.mxu0 %v1288
    %1290 = vmatprep.subr.mxu0 0.0
    %v1291 = vand.u32 %v247, 4294901760
    %v1292 = vsub.f32 %v247, %v1291
    %v1293 = vand.u32 %v1292, 4294901760
    %1294 = vmatpush2.msra.mxu0 %v1293
    %1295 = vmatprep.subr.mxu0 0.0
    %v1296 = vand.u32 %v246, 4294901760
    %v1297 = vsub.f32 %v246, %v1296
    %v1298 = vand.u32 %v1297, 4294901760
    %1299 = vmatpush2.msra.mxu0 %v1298
    %1300 = vmatprep.subr.mxu0 0.0
    %v1301 = vand.u32 %v245, 4294901760
    %v1302 = vsub.f32 %v245, %v1301
    %v1303 = vand.u32 %v1302, 4294901760
    %1304 = vmatpush2.msra.mxu0 %v1303
    %v1305 = vand.u32 %v44, 4294901760
    %1306 = vmatprep.mubr.f32.mxu0 %v1305
    %v1307 = vand.u32 %v43, 4294901760
    %1308 = vmatmul.mubr.f32.gmra.mxu0 %v1307
    %v1309 = vpop.f32.mrf.mxu0
    %v1310 = vadd.f32 %v1065, %v1309
    %v1311 = vpop.f32.mrf.mxu0
    %v1312 = vand.u32 %v46, 4294901760
    %1313 = vmatprep.mubr.f32.mxu0 %v1312
    %v1314 = vand.u32 %v45, 4294901760
    %1315 = vmatmul.mubr.f32.gmra.mxu0 %v1314
    %v1316 = vpop.f32.mrf.mxu0
    %v1317 = vadd.f32 %v1076, %v1316
    %v1318 = vpop.f32.mrf.mxu0
    %v1319 = vand.u32 %v48, 4294901760
    %1320 = vmatprep.mubr.f32.mxu0 %v1319
    %v1321 = vand.u32 %v47, 4294901760
    %1322 = vmatmul.mubr.f32.gmra.mxu0 %v1321
    %v1323 = vpop.f32.mrf.mxu0
    %v1324 = vadd.f32 %v1087, %v1323
    %v1325 = vpop.f32.mrf.mxu0
    %v1326 = vand.u32 %v50, 4294901760
    %1327 = vmatprep.mubr.f32.mxu0 %v1326
    %v1328 = vand.u32 %v49, 4294901760
    %1329 = vmatmul.mubr.f32.gmra.mxu0 %v1328
    %v1330 = vpop.f32.mrf.mxu0
    %v1331 = vadd.f32 %v1098, %v1330
    %v1332 = vpop.f32.mrf.mxu0
    %v1333 = vand.u32 %v52, 4294901760
    %1334 = vmatprep.mubr.f32.mxu0 %v1333
    %v1335 = vand.u32 %v51, 4294901760
    %1336 = vmatmul.mubr.f32.gmra.mxu0 %v1335
    %v1337 = vpop.f32.mrf.mxu0
    %v1338 = vadd.f32 %v1109, %v1337
    %v1339 = vpop.f32.mrf.mxu0
    %v1340 = vand.u32 %v54, 4294901760
    %1341 = vmatprep.mubr.f32.mxu0 %v1340
    %v1342 = vand.u32 %v53, 4294901760
    %1343 = vmatmul.mubr.f32.gmra.mxu0 %v1342
    %v1344 = vpop.f32.mrf.mxu0
    %v1345 = vadd.f32 %v1120, %v1344
    %v1346 = vpop.f32.mrf.mxu0
    %v1347 = vand.u32 %v56, 4294901760
    %1348 = vmatprep.mubr.f32.mxu0 %v1347
    %v1349 = vand.u32 %v55, 4294901760
    %1350 = vmatmul.mubr.f32.gmra.mxu0 %v1349
    %v1351 = vpop.f32.mrf.mxu0
    %v1352 = vadd.f32 %v1131, %v1351
    %v1353 = vpop.f32.mrf.mxu0
    %v1354 = vand.u32 %v58, 4294901760
    %1355 = vmatprep.mubr.f32.mxu0 %v1354
    %v1356 = vand.u32 %v57, 4294901760
    %1357 = vmatmul.mubr.f32.gmra.mxu0 %v1356
    %v1358 = vpop.f32.mrf.mxu0
    %v1359 = vadd.f32 %v1142, %v1358
    %v1360 = vpop.f32.mrf.mxu0
    %1361 = vdwg.mxu0
    %1362 = vmatprep.subr.mxu0 0.0
    %v1363 = vand.u32 %v244, 4294901760
    %1364 = vmatpush1.msra.mxu0 %v1363
    %1365 = vmatprep.subr.mxu0 0.0
    %v1366 = vand.u32 %v243, 4294901760
    %1367 = vmatpush1.msra.mxu0 %v1366
    %1368 = vmatprep.subr.mxu0 0.0
    %v1369 = vand.u32 %v242, 4294901760
    %1370 = vmatpush1.msra.mxu0 %v1369
    %1371 = vmatprep.subr.mxu0 0.0
    %v1372 = vand.u32 %v241, 4294901760
    %1373 = vmatpush1.msra.mxu0 %v1372
    %1374 = vmatprep.subr.mxu0 0.0
    %v1375 = vand.u32 %v240, 4294901760
    %1376 = vmatpush1.msra.mxu0 %v1375
    %1377 = vmatprep.subr.mxu0 0.0
    %v1378 = vand.u32 %v239, 4294901760
    %1379 = vmatpush1.msra.mxu0 %v1378
    %1380 = vmatprep.subr.mxu0 0.0
    %v1381 = vand.u32 %v238, 4294901760
    %1382 = vmatpush1.msra.mxu0 %v1381
    %1383 = vmatprep.subr.mxu0 0.0
    %v1384 = vand.u32 %v237, 4294901760
    %1385 = vmatpush1.msra.mxu0 %v1384
    %1386 = vmatprep.subr.mxu0 0.0
    %v1387 = vand.u32 %v236, 4294901760
    %1388 = vmatpush1.msra.mxu0 %v1387
    %1389 = vmatprep.subr.mxu0 0.0
    %v1390 = vand.u32 %v235, 4294901760
    %1391 = vmatpush1.msra.mxu0 %v1390
    %1392 = vmatprep.subr.mxu0 0.0
    %v1393 = vand.u32 %v234, 4294901760
    %1394 = vmatpush1.msra.mxu0 %v1393
    %1395 = vmatprep.subr.mxu0 0.0
    %v1396 = vand.u32 %v233, 4294901760
    %1397 = vmatpush1.msra.mxu0 %v1396
    %1398 = vmatprep.subr.mxu0 0.0
    %v1399 = vand.u32 %v232, 4294901760
    %1400 = vmatpush1.msra.mxu0 %v1399
    %1401 = vmatprep.subr.mxu0 0.0
    %v1402 = vand.u32 %v231, 4294901760
    %1403 = vmatpush1.msra.mxu0 %v1402
    %1404 = vmatprep.subr.mxu0 0.0
    %v1405 = vand.u32 %v230, 4294901760
    %1406 = vmatpush1.msra.mxu0 %v1405
    %1407 = vmatprep.subr.mxu0 0.0
    %v1408 = vand.u32 %v229, 4294901760
    %1409 = vmatpush1.msra.mxu0 %v1408
    %1410 = vmatprep.subr.mxu0 0.0
    %v1411 = vand.u32 %v260, 4294901760
    %1412 = vmatpush2.msra.mxu0 %v1411
    %1413 = vmatprep.subr.mxu0 0.0
    %v1414 = vand.u32 %v259, 4294901760
    %1415 = vmatpush2.msra.mxu0 %v1414
    %1416 = vmatprep.subr.mxu0 0.0
    %v1417 = vand.u32 %v258, 4294901760
    %1418 = vmatpush2.msra.mxu0 %v1417
    %1419 = vmatprep.subr.mxu0 0.0
    %v1420 = vand.u32 %v257, 4294901760
    %1421 = vmatpush2.msra.mxu0 %v1420
    %1422 = vmatprep.subr.mxu0 0.0
    %v1423 = vand.u32 %v256, 4294901760
    %1424 = vmatpush2.msra.mxu0 %v1423
    %1425 = vmatprep.subr.mxu0 0.0
    %v1426 = vand.u32 %v255, 4294901760
    %1427 = vmatpush2.msra.mxu0 %v1426
    %1428 = vmatprep.subr.mxu0 0.0
    %v1429 = vand.u32 %v254, 4294901760
    %1430 = vmatpush2.msra.mxu0 %v1429
    %1431 = vmatprep.subr.mxu0 0.0
    %v1432 = vand.u32 %v253, 4294901760
    %1433 = vmatpush2.msra.mxu0 %v1432
    %1434 = vmatprep.subr.mxu0 0.0
    %v1435 = vand.u32 %v252, 4294901760
    %1436 = vmatpush2.msra.mxu0 %v1435
    %1437 = vmatprep.subr.mxu0 0.0
    %v1438 = vand.u32 %v251, 4294901760
    %1439 = vmatpush2.msra.mxu0 %v1438
    %1440 = vmatprep.subr.mxu0 0.0
    %v1441 = vand.u32 %v250, 4294901760
    %1442 = vmatpush2.msra.mxu0 %v1441
    %1443 = vmatprep.subr.mxu0 0.0
    %v1444 = vand.u32 %v249, 4294901760
    %1445 = vmatpush2.msra.mxu0 %v1444
    %1446 = vmatprep.subr.mxu0 0.0
    %v1447 = vand.u32 %v248, 4294901760
    %1448 = vmatpush2.msra.mxu0 %v1447
    %1449 = vmatprep.subr.mxu0 0.0
    %v1450 = vand.u32 %v247, 4294901760
    %1451 = vmatpush2.msra.mxu0 %v1450
    %1452 = vmatprep.subr.mxu0 0.0
    %v1453 = vand.u32 %v246, 4294901760
    %1454 = vmatpush2.msra.mxu0 %v1453
    %1455 = vmatprep.subr.mxu0 0.0
    %v1456 = vand.u32 %v245, 4294901760
    %1457 = vmatpush2.msra.mxu0 %v1456
    %v1458 = vand.u32 %v44, 4294901760
    %1459 = vmatprep.mubr.f32.mxu0 %v1458
    %v1460 = vand.u32 %v43, 4294901760
    %1461 = vmatmul.mubr.f32.gmra.mxu0 %v1460
    %v1462 = vpop.f32.mrf.mxu0
    %v1463 = vadd.f32 %v1310, %v1462
    %v1464 = vpop.f32.mrf.mxu0
    %v1465 = vand.u32 %v46, 4294901760
    %1466 = vmatprep.mubr.f32.mxu0 %v1465
    %v1467 = vand.u32 %v45, 4294901760
    %1468 = vmatmul.mubr.f32.gmra.mxu0 %v1467
    %v1469 = vpop.f32.mrf.mxu0
    %v1470 = vadd.f32 %v1317, %v1469
    %v1471 = vpop.f32.mrf.mxu0
    %v1472 = vand.u32 %v48, 4294901760
    %1473 = vmatprep.mubr.f32.mxu0 %v1472
    %v1474 = vand.u32 %v47, 4294901760
    %1475 = vmatmul.mubr.f32.gmra.mxu0 %v1474
    %v1476 = vpop.f32.mrf.mxu0
    %v1477 = vadd.f32 %v1324, %v1476
    %v1478 = vpop.f32.mrf.mxu0
    %v1479 = vand.u32 %v50, 4294901760
    %1480 = vmatprep.mubr.f32.mxu0 %v1479
    %v1481 = vand.u32 %v49, 4294901760
    %1482 = vmatmul.mubr.f32.gmra.mxu0 %v1481
    %v1483 = vpop.f32.mrf.mxu0
    %v1484 = vadd.f32 %v1331, %v1483
    %v1485 = vpop.f32.mrf.mxu0
    %v1486 = vand.u32 %v52, 4294901760
    %1487 = vmatprep.mubr.f32.mxu0 %v1486
    %v1488 = vand.u32 %v51, 4294901760
    %1489 = vmatmul.mubr.f32.gmra.mxu0 %v1488
    %v1490 = vpop.f32.mrf.mxu0
    %v1491 = vadd.f32 %v1338, %v1490
    %v1492 = vpop.f32.mrf.mxu0
    %v1493 = vand.u32 %v54, 4294901760
    %1494 = vmatprep.mubr.f32.mxu0 %v1493
    %v1495 = vand.u32 %v53, 4294901760
    %1496 = vmatmul.mubr.f32.gmra.mxu0 %v1495
    %v1497 = vpop.f32.mrf.mxu0
    %v1498 = vadd.f32 %v1345, %v1497
    %v1499 = vpop.f32.mrf.mxu0
    %v1500 = vand.u32 %v56, 4294901760
    %1501 = vmatprep.mubr.f32.mxu0 %v1500
    %v1502 = vand.u32 %v55, 4294901760
    %1503 = vmatmul.mubr.f32.gmra.mxu0 %v1502
    %v1504 = vpop.f32.mrf.mxu0
    %v1505 = vadd.f32 %v1352, %v1504
    %v1506 = vpop.f32.mrf.mxu0
    %v1507 = vand.u32 %v58, 4294901760
    %1508 = vmatprep.mubr.f32.mxu0 %v1507
    %v1509 = vand.u32 %v57, 4294901760
    %1510 = vmatmul.mubr.f32.gmra.mxu0 %v1509
    %v1511 = vpop.f32.mrf.mxu0
    %v1512 = vadd.f32 %v1359, %v1511
    %v1513 = vpop.f32.mrf.mxu0
    %1514 = vdwg.mxu0
    %v1515 = vmul.f32 %v1463, %v1491
    %v1516 = vmul.f32 %v1470, %v1498
    %v1517 = vmul.f32 %v1477, %v1505
    %v1518 = vmul.f32 %v1484, %v1512
    %v1519 = vadd.f32 %v1515, %v1516
    %v1520 = vadd.f32 %v1519, %v1517
    %v1521 = vadd.f32 %v1520, %v1518
    %v1522 = vrot.slane %v1521, 4
    %v1523 = vadd.f32 %v1521, %v1522
    %v1524 = vrot.slane %v1523, 2
    %v1525 = vadd.f32 %v1523, %v1524
    %v1526 = vrot.slane %v1525, 1
    %v1527 = vadd.f32 %v1525, %v1526
    %1528 = vst [vmem:[#allocation7] sm:$0x1] %v1527
    // Predicated region
    $region22: #{tpu_custom_call.1} parent=1 // pred_check
      _
    $region23: #{tpu_custom_call.1} parent=1 // pred_check_branch
      %1530 = sbr.rel (0) target = $region25
    $region24: #{tpu_custom_call.1} parent=1 // pred_region
      %s1532 = ssub.s32 16, 16
      %1533 = vsyncadd [#allocation4], %s1532
      %s1535 = sshll.u32 [#allocation7], 4
      %s1536 = int_to_ptr.vmem [resolvable:$true] %s1535
      %1538 = dma.vmem_to_hbm [thread:$0]  %s1536, 16, %s3, [#allocation4]
    $region25: #{tpu_custom_call.1} parent=1 // pred_fallthru
      _
    // Predicated region
    $region26: #{tpu_custom_call.1} parent=1 // pred_check
      _
    $region27: #{tpu_custom_call.1} parent=1 // pred_check_branch
      %1540 = sbr.rel (0) target = $region29
    $region28: #{tpu_custom_call.1} parent=1 // pred_region
      %1541 = dma.done [#allocation4], 16
    $region29: #{tpu_custom_call.1} parent=1 // pred_fallthru
      _
    %1542 = vsyncpa [#allocation3], 1
    %1543 = vsyncpa [#allocation6], 1
    %1544 = vsyncpa [#allocation4], 1

</llo_original>
